<compile_context>
chip_gen: v7x
topology: tpu7x:2x2x1
jax: 0.10.0
libtpu: 0.0.40
codegen_flags: <defaults>
</compile_context>

<pallas_src>
import functools

import jax
import jax.numpy as jnp
import numpy as np
from jax import lax
from jax.experimental import pallas as pl
from jax.experimental.pallas import tpu as pltpu


# ------------------------------ fused kernel --------------------------------

def _fused_encoder_kernel(*refs, L, Kmax, num_layers, PAD):
    # operand order: idx, emb_tab (fused emb @ emb_fc_w), emb_fc_b,
    #                [conv_w, conv_b]*num_layers, fc_w, fc_b, hid_w, hid_b
    #                | logit, hidden | padbuf (scratch)
    idx_ref, tab_ref, efc_b_ref = refs[0:3]
    conv_refs = refs[3:3 + 2 * num_layers]
    fc_w_ref, fc_b_ref, hid_w_ref, hid_b_ref = refs[3 + 2 * num_layers:7 + 2 * num_layers]
    logit_ref, hidden_ref, padbuf = refs[7 + 2 * num_layers:]

    BL = idx_ref.shape[0]
    B = BL // L
    V = tab_ref.shape[0]
    Cpad = tab_ref.shape[1]

    # --- fused embedding lookup + emb_fc + ReLU (dropout == identity at inference) ---
    # relu(E[idx] @ W + b) == relu(onehot @ (E @ W) + b); (E @ W) packed host-side.
    idx = idx_ref[...]                                            # (BL, 1) int32
    iota_v = lax.broadcasted_iota(jnp.int32, (BL, V), 1)
    onehot = (iota_v == idx).astype(jnp.float32)                  # (BL, V)
    x = jnp.dot(onehot, tab_ref[...],
                preferred_element_type=jnp.float32) + efc_b_ref[...]
    act = jnp.maximum(x, 0.0)                                     # (BL, Cpad)

    # --- TextCNN layers: causal conv over all filter sizes in one pass ---
    padbuf[...] = jnp.zeros_like(padbuf)                          # zero left pad once
    for l in range(num_layers):
        w_ref = conv_refs[2 * l]                                  # (Kmax, Cpad, Cpad)
        b_ref = conv_refs[2 * l + 1]                              # (1, Cpad)
        # write current activation after the (sublane-aligned) left pad
        padbuf[:, pl.ds(PAD, L), :] = act.reshape(B, L, Cpad)
        acc = jnp.zeros((BL, Cpad), jnp.float32)
        for s in range(Kmax):                                     # Kmax matmuls / layer
            xs = padbuf[:, pl.ds(PAD - (Kmax - 1) + s, L), :].reshape(BL, Cpad)
            acc = acc + jnp.dot(xs, w_ref[s],
                                preferred_element_type=jnp.float32)
        act = jnp.maximum(acc + b_ref[...], 0.0)                  # relu(concat(convs))

    # --- max-pool over time ---
    pooled = jnp.max(act.reshape(B, L, Cpad), axis=1)             # (B, Cpad)

    # --- fc + ReLU, then classifier ---
    hid = jnp.maximum(
        jnp.dot(pooled, fc_w_ref[...],
                preferred_element_type=jnp.float32) + fc_b_ref[...], 0.0)
    logit = jnp.dot(hid, hid_w_ref[...],
                    preferred_element_type=jnp.float32) + hid_b_ref[...]

    hidden_ref[...] = hid.astype(hidden_ref.dtype)
    logit_ref[...] = logit.astype(logit_ref.dtype)


# ------------------------------ Encoder glue --------------------------------

def pack_params(params, cfg):
    """Pack PyTorch-style params into the fused kernel's uniform layout."""
    E = cfg["emb_dims"]
    F = cfg["filters"]
    fn = cfg["filter_num"]
    nl = cfg["num_layers"]
    nc = cfg["num_classes"]
    Kmax = max(F)
    Cout = fn * len(F)
    Cpad = max(E, Cout)

    def pad2(w, rows, cols):
        r, c = w.shape
        return jnp.zeros((rows, cols), jnp.float32).at[:r, :c].set(w)

    # Fold embedding table and emb_fc weight once at pack time: (V, Cpad).
    emb_tab = jnp.dot(params["emb"].astype(jnp.float32),
                      pad2(params["emb_fc_w"], E, Cpad),
                      precision=lax.Precision.HIGHEST)

    packed = {
        "emb_tab": emb_tab,                                           # (V, Cpad)
        "emb_fc_b": pad2(params["emb_fc_b"].reshape(1, -1), 1, Cpad),
        "fc_w": pad2(params["fc_w"], Cpad, E),                        # (Cpad, E)
        "fc_b": params["fc_b"].reshape(1, E).astype(jnp.float32),
        "hid_w": params["hid_w"].astype(jnp.float32),                 # (E, nc)
        "hid_b": params["hid_b"].reshape(1, nc).astype(jnp.float32),
        "conv_w": [],
        "conv_b": [],
    }
    for l in range(nl):
        cin = E if l == 0 else Cout
        w_l = jnp.zeros((Kmax, Cpad, Cpad), jnp.float32)
        b_l = jnp.zeros((1, Cpad), jnp.float32)
        for fi, f in enumerate(F):
            w = params["conv_w"][l][fi]        # (f, cin, fn)
            b = params["conv_b"][l][fi]        # (fn,)
            for k in range(f):
                s = Kmax - f + k               # tap k of filter f lives at shift s
                w_l = w_l.at[s, :cin, fi * fn:(fi + 1) * fn].set(w[k])
            b_l = b_l.at[0, fi * fn:(fi + 1) * fn].set(b)
        packed["conv_w"].append(w_l)
        packed["conv_b"].append(b_l)
    return packed


def encoder_forward(packed, x_indx, cfg):
    """x_indx: int32 (B, 1, max_words) -> (logit (B, num_classes), hidden (B, E))."""
    E = cfg["emb_dims"]
    F = cfg["filters"]
    fn = cfg["filter_num"]
    nl = cfg["num_layers"]
    nc = cfg["num_classes"]
    Kmax = max(F)
    Cpad = max(E, fn * len(F))
    PAD = max(8, ((Kmax - 1 + 7) // 8) * 8)    # sublane-aligned causal left pad

    B = x_indx.shape[0]
    L = x_indx.shape[-1]
    idx2 = x_indx[:, 0, :].reshape(B * L, 1).astype(jnp.int32)   # torch: squeeze(1)

    operands = [idx2, packed["emb_tab"], packed["emb_fc_b"]]
    for l in range(nl):
        operands += [packed["conv_w"][l], packed["conv_b"][l]]
    operands += [packed["fc_w"], packed["fc_b"], packed["hid_w"], packed["hid_b"]]

    kernel = functools.partial(_fused_encoder_kernel, L=L, Kmax=Kmax,
                               num_layers=nl, PAD=PAD)
    logit, hidden = pl.pallas_call(
        kernel,
        out_shape=(jax.ShapeDtypeStruct((B, nc), jnp.float32),
                   jax.ShapeDtypeStruct((B, E), jnp.float32)),
        scratch_shapes=[pltpu.VMEM((B, L + PAD, Cpad), jnp.float32)],
    )(*operands)
    return logit, hidden


# --------------------------- pure-JAX reference -----------------------------

def ref_forward(params, x_indx, cfg):
    P = lax.Precision.HIGHEST
    idx = x_indx[:, 0, :]
    wx = params["emb"][idx]
    x = jax.nn.relu(jnp.dot(wx, params["emb_fc_w"], precision=P) + params["emb_fc_b"])
    act = jnp.transpose(x, (0, 2, 1))                        # NCL, like torch
    for l in range(cfg["num_layers"]):
        outs = []
        for fi, f in enumerate(cfg["filters"]):
            w_oik = jnp.transpose(params["conv_w"][l][fi], (2, 1, 0))   # (Cout, Cin, K)
            b = params["conv_b"][l][fi]
            pad = jnp.pad(act, ((0, 0), (0, 0), (f - 1, 0)))
            y = lax.conv_general_dilated(pad, w_oik, (1,), "VALID",
                                         dimension_numbers=("NCH", "OIH", "NCH"),
                                         precision=P)
            outs.append(y + b[None, :, None])
        act = jax.nn.relu(jnp.concatenate(outs, axis=1))
    pooled = jnp.max(act, axis=2)
    hidden = jax.nn.relu(jnp.dot(pooled, params["fc_w"], precision=P) + params["fc_b"])
    logit = jnp.dot(hidden, params["hid_w"], precision=P) + params["hid_b"]
    return logit, hidden


# ------------------------------ parameters ----------------------------------

def init_params(key, cfg):
    E, V = cfg["emb_dims"], cfg["vocab"]
    F, fn, nl, nc = cfg["filters"], cfg["filter_num"], cfg["num_layers"], cfg["num_classes"]
    keys = iter(jax.random.split(key, 8 + 2 * nl * len(F)))

    def dense(k, fan_in, shape):
        return (jax.random.normal(k, shape, jnp.float32) / np.sqrt(fan_in)).astype(jnp.float32)

    params = {
        "emb": jax.random.normal(next(keys), (V, E), jnp.float32),
        "emb_fc_w": dense(next(keys), E, (E, E)),
        "emb_fc_b": jnp.zeros((E,), jnp.float32),
        "fc_w": dense(next(keys), len(F) * fn, (len(F) * fn, E)),
        "fc_b": jnp.zeros((E,), jnp.float32),
        "hid_w": dense(next(keys), E, (E, nc)),
        "hid_b": jnp.zeros((nc,), jnp.float32),
        "conv_w": [],
        "conv_b": [],
    }
    for l in range(nl):
        cin = E if l == 0 else fn * len(F)
        ws, bs = [], []
        for f in F:
            ws.append(dense(next(keys), cin * f, (f, cin, fn)))   # (K, Cin, Cout)
            bs.append(0.01 * jnp.ones((fn,), jnp.float32))
        params["conv_w"].append(ws)
        params["conv_b"].append(bs)
    return params


# --------------------------------- main --------------------------------------

if __name__ == "__main__":
    cfg = dict(
        vocab=50,
        emb_dims=32,       # word_hidden_dim == opt.emb_dims
        max_words=16,
        filters=(3, 4, 5),
        filter_num=8,
        num_layers=2,
        num_classes=4,
    )
    key = jax.random.PRNGKey(0)
    k_param, k_idx = jax.random.split(key)
    params = init_params(k_param, cfg)
    packed = pack_params(params, cfg)

    # x_indx: (batch, 1, max_words) int32 word indices (torch squeezes dim 1)
    x_indx = jax.random.randint(k_idx, (2, 1, cfg["max_words"]), 0, cfg["vocab"], dtype=jnp.int32)

    fwd = jax.jit(functools.partial(encoder_forward, cfg=cfg))
    logit, hidden = fwd(packed, x_indx)
    jax.block_until_ready((logit, hidden))

    logit_ref, hidden_ref = ref_forward(params, x_indx, cfg)
    np.testing.assert_allclose(np.asarray(logit), np.asarray(logit_ref), rtol=2e-3, atol=2e-3)
    np.testing.assert_allclose(np.asarray(hidden), np.asarray(hidden_ref), rtol=2e-3, atol=2e-3)

    assert logit.shape == (2, cfg["num_classes"]) and hidden.shape == (2, cfg["emb_dims"])
    print("KERNEL_OK")
</pallas_src>

<mosaic_0001>
module attributes {stable_mosaic.version = 11 : i64} {
  func.func @_fused_encoder_kernel(%arg0: memref<32x1xi32, #tpu.memory_space<vmem>>, %arg1: memref<50x32xf32, #tpu.memory_space<vmem>>, %arg2: memref<1x32xf32, #tpu.memory_space<vmem>>, %arg3: memref<5x32x32xf32, #tpu.memory_space<vmem>>, %arg4: memref<1x32xf32, #tpu.memory_space<vmem>>, %arg5: memref<5x32x32xf32, #tpu.memory_space<vmem>>, %arg6: memref<1x32xf32, #tpu.memory_space<vmem>>, %arg7: memref<32x32xf32, #tpu.memory_space<vmem>>, %arg8: memref<1x32xf32, #tpu.memory_space<vmem>>, %arg9: memref<32x4xf32, #tpu.memory_space<vmem>>, %arg10: memref<1x4xf32, #tpu.memory_space<vmem>>, %arg11: memref<2x4xf32, #tpu.memory_space<vmem>>, %arg12: memref<2x32xf32, #tpu.memory_space<vmem>>, %arg13: memref<2x24x32xf32, #tpu.memory_space<vmem>>) attributes {dimension_semantics = [], scalar_prefetch = 0 : i64, scratch_operands = 1 : i64, tpu.core_type = #tpu.core_type<tc>} {
    %c0 = arith.constant 0 : index
    %c0_0 = arith.constant 0 : index
    %0 = vector.load %arg0[%c0, %c0_0] : memref<32x1xi32, #tpu.memory_space<vmem>>, vector<32x1xi32>
    %1 = tpu.iota {dimensions = array<i32: 1>} : vector<32x50xi32>
    %2 = vector.broadcast %0 : vector<32x1xi32> to vector<32x50xi32>
    %3 = arith.cmpi eq, %1, %2 : vector<32x50xi32>
    %4 = arith.extui %3 : vector<32x50xi1> to vector<32x50xi32>
    %5 = arith.sitofp %4 : vector<32x50xi32> to vector<32x50xf32>
    %c0_1 = arith.constant 0 : index
    %c0_2 = arith.constant 0 : index
    %6 = vector.load %arg1[%c0_1, %c0_2] : memref<50x32xf32, #tpu.memory_space<vmem>>, vector<50x32xf32>
    %cst = arith.constant dense<0.000000e+00> : vector<32x32xf32>
    %7 = tpu.matmul %5, %6, %cst {dimension_numbers = #tpu.dot_dimension_numbers<[1], [0], [0], [1], [0, 0, 1, 1], [], []>} : vector<32x50xf32>, vector<50x32xf32>, vector<32x32xf32> -> vector<32x32xf32>
    %c0_3 = arith.constant 0 : index
    %c0_4 = arith.constant 0 : index
    %8 = vector.load %arg2[%c0_3, %c0_4] : memref<1x32xf32, #tpu.memory_space<vmem>>, vector<1x32xf32>
    %9 = vector.broadcast %8 : vector<1x32xf32> to vector<32x32xf32>
    %10 = arith.addf %7, %9 : vector<32x32xf32>
    %cst_5 = arith.constant 0.000000e+00 : f32
    %11 = vector.broadcast %cst_5 : f32 to vector<32x32xf32>
    %12 = arith.maximumf %10, %11 : vector<32x32xf32>
    %cst_6 = arith.constant 0.000000e+00 : f32
    %13 = vector.broadcast %cst_6 : f32 to vector<2x24x32xf32>
    %c0_7 = arith.constant 0 : index
    %c0_8 = arith.constant 0 : index
    %c0_9 = arith.constant 0 : index
    %14 = vector.load %arg13[%c0_7, %c0_8, %c0_9] : memref<2x24x32xf32, #tpu.memory_space<vmem>>, vector<2x24x32xf32>
    tpu.vector_store %arg13[%c0_7, %c0_8, %c0_9], %13 {strides = array<i32>} : memref<2x24x32xf32, #tpu.memory_space<vmem>>, vector<2x24x32xf32>,
    %15 = vector.shape_cast %12 : vector<32x32xf32> to vector<2x16x32xf32>
    %c0_10 = arith.constant 0 : index
    %c8 = arith.constant 8 : index
    %c0_11 = arith.constant 0 : index
    %16 = vector.load %arg13[%c0_10, %c8, %c0_11] : memref<2x24x32xf32, #tpu.memory_space<vmem>>, vector<2x16x32xf32>
    tpu.vector_store %arg13[%c0_10, %c8, %c0_11], %15 {strides = array<i32>} : memref<2x24x32xf32, #tpu.memory_space<vmem>>, vector<2x16x32xf32>,
    %cst_12 = arith.constant 0.000000e+00 : f32
    %17 = vector.broadcast %cst_12 : f32 to vector<32x32xf32>
    %c0_13 = arith.constant 0 : index
    %c4 = arith.constant 4 : index
    %c0_14 = arith.constant 0 : index
    %18 = vector.load %arg13[%c0_13, %c4, %c0_14] : memref<2x24x32xf32, #tpu.memory_space<vmem>>, vector<2x16x32xf32>
    %19 = vector.shape_cast %18 : vector<2x16x32xf32> to vector<32x32xf32>
    %c0_15 = arith.constant 0 : index
    %c0_16 = arith.constant 0 : index
    %c0_17 = arith.constant 0 : index
    %20 = vector.load %arg3[%c0_15, %c0_16, %c0_17] : memref<5x32x32xf32, #tpu.memory_space<vmem>>, vector<1x32x32xf32>
    %21 = vector.shape_cast %20 : vector<1x32x32xf32> to vector<32x32xf32>
    %cst_18 = arith.constant dense<0.000000e+00> : vector<32x32xf32>
    %22 = tpu.matmul %19, %21, %cst_18 {dimension_numbers = #tpu.dot_dimension_numbers<[1], [0], [0], [1], [0, 0, 1, 1], [], []>} : vector<32x32xf32>, vector<32x32xf32>, vector<32x32xf32> -> vector<32x32xf32>
    %23 = arith.addf %17, %22 : vector<32x32xf32>
    %c0_19 = arith.constant 0 : index
    %c5 = arith.constant 5 : index
    %c0_20 = arith.constant 0 : index
    %24 = vector.load %arg13[%c0_19, %c5, %c0_20] : memref<2x24x32xf32, #tpu.memory_space<vmem>>, vector<2x16x32xf32>
    %25 = vector.shape_cast %24 : vector<2x16x32xf32> to vector<32x32xf32>
    %c1 = arith.constant 1 : index
    %c0_21 = arith.constant 0 : index
    %c0_22 = arith.constant 0 : index
    %26 = vector.load %arg3[%c1, %c0_21, %c0_22] : memref<5x32x32xf32, #tpu.memory_space<vmem>>, vector<1x32x32xf32>
    %27 = vector.shape_cast %26 : vector<1x32x32xf32> to vector<32x32xf32>
    %cst_23 = arith.constant dense<0.000000e+00> : vector<32x32xf32>
    %28 = tpu.matmul %25, %27, %cst_23 {dimension_numbers = #tpu.dot_dimension_numbers<[1], [0], [0], [1], [0, 0, 1, 1], [], []>} : vector<32x32xf32>, vector<32x32xf32>, vector<32x32xf32> -> vector<32x32xf32>
    %29 = arith.addf %23, %28 : vector<32x32xf32>
    %c0_24 = arith.constant 0 : index
    %c6 = arith.constant 6 : index
    %c0_25 = arith.constant 0 : index
    %30 = vector.load %arg13[%c0_24, %c6, %c0_25] : memref<2x24x32xf32, #tpu.memory_space<vmem>>, vector<2x16x32xf32>
    %31 = vector.shape_cast %30 : vector<2x16x32xf32> to vector<32x32xf32>
    %c2 = arith.constant 2 : index
    %c0_26 = arith.constant 0 : index
    %c0_27 = arith.constant 0 : index
    %32 = vector.load %arg3[%c2, %c0_26, %c0_27] : memref<5x32x32xf32, #tpu.memory_space<vmem>>, vector<1x32x32xf32>
    %33 = vector.shape_cast %32 : vector<1x32x32xf32> to vector<32x32xf32>
    %cst_28 = arith.constant dense<0.000000e+00> : vector<32x32xf32>
    %34 = tpu.matmul %31, %33, %cst_28 {dimension_numbers = #tpu.dot_dimension_numbers<[1], [0], [0], [1], [0, 0, 1, 1], [], []>} : vector<32x32xf32>, vector<32x32xf32>, vector<32x32xf32> -> vector<32x32xf32>
    %35 = arith.addf %29, %34 : vector<32x32xf32>
    %c0_29 = arith.constant 0 : index
    %c7 = arith.constant 7 : index
    %c0_30 = arith.constant 0 : index
    %36 = vector.load %arg13[%c0_29, %c7, %c0_30] : memref<2x24x32xf32, #tpu.memory_space<vmem>>, vector<2x16x32xf32>
    %37 = vector.shape_cast %36 : vector<2x16x32xf32> to vector<32x32xf32>
    %c3 = arith.constant 3 : index
    %c0_31 = arith.constant 0 : index
    %c0_32 = arith.constant 0 : index
    %38 = vector.load %arg3[%c3, %c0_31, %c0_32] : memref<5x32x32xf32, #tpu.memory_space<vmem>>, vector<1x32x32xf32>
    %39 = vector.shape_cast %38 : vector<1x32x32xf32> to vector<32x32xf32>
    %cst_33 = arith.constant dense<0.000000e+00> : vector<32x32xf32>
    %40 = tpu.matmul %37, %39, %cst_33 {dimension_numbers = #tpu.dot_dimension_numbers<[1], [0], [0], [1], [0, 0, 1, 1], [], []>} : vector<32x32xf32>, vector<32x32xf32>, vector<32x32xf32> -> vector<32x32xf32>
    %41 = arith.addf %35, %40 : vector<32x32xf32>
    %c0_34 = arith.constant 0 : index
    %c8_35 = arith.constant 8 : index
    %c0_36 = arith.constant 0 : index
    %42 = vector.load %arg13[%c0_34, %c8_35, %c0_36] : memref<2x24x32xf32, #tpu.memory_space<vmem>>, vector<2x16x32xf32>
    %43 = vector.shape_cast %42 : vector<2x16x32xf32> to vector<32x32xf32>
    %c4_37 = arith.constant 4 : index
    %c0_38 = arith.constant 0 : index
    %c0_39 = arith.constant 0 : index
    %44 = vector.load %arg3[%c4_37, %c0_38, %c0_39] : memref<5x32x32xf32, #tpu.memory_space<vmem>>, vector<1x32x32xf32>
    %45 = vector.shape_cast %44 : vector<1x32x32xf32> to vector<32x32xf32>
    %cst_40 = arith.constant dense<0.000000e+00> : vector<32x32xf32>
    %46 = tpu.matmul %43, %45, %cst_40 {dimension_numbers = #tpu.dot_dimension_numbers<[1], [0], [0], [1], [0, 0, 1, 1], [], []>} : vector<32x32xf32>, vector<32x32xf32>, vector<32x32xf32> -> vector<32x32xf32>
    %47 = arith.addf %41, %46 : vector<32x32xf32>
    %c0_41 = arith.constant 0 : index
    %c0_42 = arith.constant 0 : index
    %48 = vector.load %arg4[%c0_41, %c0_42] : memref<1x32xf32, #tpu.memory_space<vmem>>, vector<1x32xf32>
    %49 = vector.broadcast %48 : vector<1x32xf32> to vector<32x32xf32>
    %50 = arith.addf %47, %49 : vector<32x32xf32>
    %cst_43 = arith.constant 0.000000e+00 : f32
    %51 = vector.broadcast %cst_43 : f32 to vector<32x32xf32>
    %52 = arith.maximumf %50, %51 : vector<32x32xf32>
    %53 = vector.shape_cast %52 : vector<32x32xf32> to vector<2x16x32xf32>
    %c0_44 = arith.constant 0 : index
    %c8_45 = arith.constant 8 : index
    %c0_46 = arith.constant 0 : index
    %54 = vector.load %arg13[%c0_44, %c8_45, %c0_46] : memref<2x24x32xf32, #tpu.memory_space<vmem>>, vector<2x16x32xf32>
    tpu.vector_store %arg13[%c0_44, %c8_45, %c0_46], %53 {strides = array<i32>} : memref<2x24x32xf32, #tpu.memory_space<vmem>>, vector<2x16x32xf32>,
    %cst_47 = arith.constant 0.000000e+00 : f32
    %55 = vector.broadcast %cst_47 : f32 to vector<32x32xf32>
    %c0_48 = arith.constant 0 : index
    %c4_49 = arith.constant 4 : index
    %c0_50 = arith.constant 0 : index
    %56 = vector.load %arg13[%c0_48, %c4_49, %c0_50] : memref<2x24x32xf32, #tpu.memory_space<vmem>>, vector<2x16x32xf32>
    %57 = vector.shape_cast %56 : vector<2x16x32xf32> to vector<32x32xf32>
    %c0_51 = arith.constant 0 : index
    %c0_52 = arith.constant 0 : index
    %c0_53 = arith.constant 0 : index
    %58 = vector.load %arg5[%c0_51, %c0_52, %c0_53] : memref<5x32x32xf32, #tpu.memory_space<vmem>>, vector<1x32x32xf32>
    %59 = vector.shape_cast %58 : vector<1x32x32xf32> to vector<32x32xf32>
    %cst_54 = arith.constant dense<0.000000e+00> : vector<32x32xf32>
    %60 = tpu.matmul %57, %59, %cst_54 {dimension_numbers = #tpu.dot_dimension_numbers<[1], [0], [0], [1], [0, 0, 1, 1], [], []>} : vector<32x32xf32>, vector<32x32xf32>, vector<32x32xf32> -> vector<32x32xf32>
    %61 = arith.addf %55, %60 : vector<32x32xf32>
    %c0_55 = arith.constant 0 : index
    %c5_56 = arith.constant 5 : index
    %c0_57 = arith.constant 0 : index
    %62 = vector.load %arg13[%c0_55, %c5_56, %c0_57] : memref<2x24x32xf32, #tpu.memory_space<vmem>>, vector<2x16x32xf32>
    %63 = vector.shape_cast %62 : vector<2x16x32xf32> to vector<32x32xf32>
    %c1_58 = arith.constant 1 : index
    %c0_59 = arith.constant 0 : index
    %c0_60 = arith.constant 0 : index
    %64 = vector.load %arg5[%c1_58, %c0_59, %c0_60] : memref<5x32x32xf32, #tpu.memory_space<vmem>>, vector<1x32x32xf32>
    %65 = vector.shape_cast %64 : vector<1x32x32xf32> to vector<32x32xf32>
    %cst_61 = arith.constant dense<0.000000e+00> : vector<32x32xf32>
    %66 = tpu.matmul %63, %65, %cst_61 {dimension_numbers = #tpu.dot_dimension_numbers<[1], [0], [0], [1], [0, 0, 1, 1], [], []>} : vector<32x32xf32>, vector<32x32xf32>, vector<32x32xf32> -> vector<32x32xf32>
    %67 = arith.addf %61, %66 : vector<32x32xf32>
    %c0_62 = arith.constant 0 : index
    %c6_63 = arith.constant 6 : index
    %c0_64 = arith.constant 0 : index
    %68 = vector.load %arg13[%c0_62, %c6_63, %c0_64] : memref<2x24x32xf32, #tpu.memory_space<vmem>>, vector<2x16x32xf32>
    %69 = vector.shape_cast %68 : vector<2x16x32xf32> to vector<32x32xf32>
    %c2_65 = arith.constant 2 : index
    %c0_66 = arith.constant 0 : index
    %c0_67 = arith.constant 0 : index
    %70 = vector.load %arg5[%c2_65, %c0_66, %c0_67] : memref<5x32x32xf32, #tpu.memory_space<vmem>>, vector<1x32x32xf32>
    %71 = vector.shape_cast %70 : vector<1x32x32xf32> to vector<32x32xf32>
    %cst_68 = arith.constant dense<0.000000e+00> : vector<32x32xf32>
    %72 = tpu.matmul %69, %71, %cst_68 {dimension_numbers = #tpu.dot_dimension_numbers<[1], [0], [0], [1], [0, 0, 1, 1], [], []>} : vector<32x32xf32>, vector<32x32xf32>, vector<32x32xf32> -> vector<32x32xf32>
    %73 = arith.addf %67, %72 : vector<32x32xf32>
    %c0_69 = arith.constant 0 : index
    %c7_70 = arith.constant 7 : index
    %c0_71 = arith.constant 0 : index
    %74 = vector.load %arg13[%c0_69, %c7_70, %c0_71] : memref<2x24x32xf32, #tpu.memory_space<vmem>>, vector<2x16x32xf32>
    %75 = vector.shape_cast %74 : vector<2x16x32xf32> to vector<32x32xf32>
    %c3_72 = arith.constant 3 : index
    %c0_73 = arith.constant 0 : index
    %c0_74 = arith.constant 0 : index
    %76 = vector.load %arg5[%c3_72, %c0_73, %c0_74] : memref<5x32x32xf32, #tpu.memory_space<vmem>>, vector<1x32x32xf32>
    %77 = vector.shape_cast %76 : vector<1x32x32xf32> to vector<32x32xf32>
    %cst_75 = arith.constant dense<0.000000e+00> : vector<32x32xf32>
    %78 = tpu.matmul %75, %77, %cst_75 {dimension_numbers = #tpu.dot_dimension_numbers<[1], [0], [0], [1], [0, 0, 1, 1], [], []>} : vector<32x32xf32>, vector<32x32xf32>, vector<32x32xf32> -> vector<32x32xf32>
    %79 = arith.addf %73, %78 : vector<32x32xf32>
    %c0_76 = arith.constant 0 : index
    %c8_77 = arith.constant 8 : index
    %c0_78 = arith.constant 0 : index
    %80 = vector.load %arg13[%c0_76, %c8_77, %c0_78] : memref<2x24x32xf32, #tpu.memory_space<vmem>>, vector<2x16x32xf32>
    %81 = vector.shape_cast %80 : vector<2x16x32xf32> to vector<32x32xf32>
    %c4_79 = arith.constant 4 : index
    %c0_80 = arith.constant 0 : index
    %c0_81 = arith.constant 0 : index
    %82 = vector.load %arg5[%c4_79, %c0_80, %c0_81] : memref<5x32x32xf32, #tpu.memory_space<vmem>>, vector<1x32x32xf32>
    %83 = vector.shape_cast %82 : vector<1x32x32xf32> to vector<32x32xf32>
    %cst_82 = arith.constant dense<0.000000e+00> : vector<32x32xf32>
    %84 = tpu.matmul %81, %83, %cst_82 {dimension_numbers = #tpu.dot_dimension_numbers<[1], [0], [0], [1], [0, 0, 1, 1], [], []>} : vector<32x32xf32>, vector<32x32xf32>, vector<32x32xf32> -> vector<32x32xf32>
    %85 = arith.addf %79, %84 : vector<32x32xf32>
    %c0_83 = arith.constant 0 : index
    %c0_84 = arith.constant 0 : index
    %86 = vector.load %arg6[%c0_83, %c0_84] : memref<1x32xf32, #tpu.memory_space<vmem>>, vector<1x32xf32>
    %87 = vector.broadcast %86 : vector<1x32xf32> to vector<32x32xf32>
    %88 = arith.addf %85, %87 : vector<32x32xf32>
    %cst_85 = arith.constant 0.000000e+00 : f32
    %89 = vector.broadcast %cst_85 : f32 to vector<32x32xf32>
    %90 = arith.maximumf %88, %89 : vector<32x32xf32>
    %91 = vector.shape_cast %90 : vector<32x32xf32> to vector<2x16x32xf32>
    %cst_86 = arith.constant dense<0xFF800000> : vector<2x32xf32>
    %92 = vector.multi_reduction <maximumf>, %91, %cst_86 [1] : vector<2x16x32xf32> to vector<2x32xf32>
    %c0_87 = arith.constant 0 : index
    %c0_88 = arith.constant 0 : index
    %93 = vector.load %arg7[%c0_87, %c0_88] : memref<32x32xf32, #tpu.memory_space<vmem>>, vector<32x32xf32>
    %cst_89 = arith.constant dense<0.000000e+00> : vector<2x32xf32>
    %94 = tpu.matmul %92, %93, %cst_89 {dimension_numbers = #tpu.dot_dimension_numbers<[1], [0], [0], [1], [0, 0, 1, 1], [], []>} : vector<2x32xf32>, vector<32x32xf32>, vector<2x32xf32> -> vector<2x32xf32>
    %c0_90 = arith.constant 0 : index
    %c0_91 = arith.constant 0 : index
    %95 = vector.load %arg8[%c0_90, %c0_91] : memref<1x32xf32, #tpu.memory_space<vmem>>, vector<1x32xf32>
    %96 = vector.broadcast %95 : vector<1x32xf32> to vector<2x32xf32>
    %97 = arith.addf %94, %96 : vector<2x32xf32>
    %cst_92 = arith.constant 0.000000e+00 : f32
    %98 = vector.broadcast %cst_92 : f32 to vector<2x32xf32>
    %99 = arith.maximumf %97, %98 : vector<2x32xf32>
    %c0_93 = arith.constant 0 : index
    %c0_94 = arith.constant 0 : index
    %100 = vector.load %arg9[%c0_93, %c0_94] : memref<32x4xf32, #tpu.memory_space<vmem>>, vector<32x4xf32>
    %cst_95 = arith.constant dense<0.000000e+00> : vector<2x4xf32>
    %101 = tpu.matmul %99, %100, %cst_95 {dimension_numbers = #tpu.dot_dimension_numbers<[1], [0], [0], [1], [0, 0, 1, 1], [], []>} : vector<2x32xf32>, vector<32x4xf32>, vector<2x4xf32> -> vector<2x4xf32>
    %c0_96 = arith.constant 0 : index
    %c0_97 = arith.constant 0 : index
    %102 = vector.load %arg10[%c0_96, %c0_97] : memref<1x4xf32, #tpu.memory_space<vmem>>, vector<1x4xf32>
    %103 = vector.broadcast %102 : vector<1x4xf32> to vector<2x4xf32>
    %104 = arith.addf %101, %103 : vector<2x4xf32>
    %c0_98 = arith.constant 0 : index
    %c0_99 = arith.constant 0 : index
    %105 = vector.load %arg12[%c0_98, %c0_99] : memref<2x32xf32, #tpu.memory_space<vmem>>, vector<2x32xf32>
    tpu.vector_store %arg12[%c0_98, %c0_99], %99 {strides = array<i32>} : memref<2x32xf32, #tpu.memory_space<vmem>>, vector<2x32xf32>,
    %c0_100 = arith.constant 0 : index
    %c0_101 = arith.constant 0 : index
    %106 = vector.load %arg11[%c0_100, %c0_101] : memref<2x4xf32, #tpu.memory_space<vmem>>, vector<2x4xf32>
    tpu.vector_store %arg11[%c0_100, %c0_101], %104 {strides = array<i32>} : memref<2x4xf32, #tpu.memory_space<vmem>>, vector<2x4xf32>,
    return
  }
}

</mosaic_0001>

<llo_original>
// kernel: squeeze.0
$region0: #{squeeze.0}
  %s0 = inlined_call_operand.vmem [shape: s32[2,16], index: 0, kind: input, shape index: {}]
  %s1 = inlined_call_operand.vmem [shape: s32[32,1], index: 1, kind: output, shape index: {}]
  $region1: #{squeeze.0} parent=0
    #allocation0 [shape = 'u8[4096]{0}', space=vmem, size = 0x1000, scoped, tag = 'scoped mem for input reshape']
    %s3 = sshllo.u32 0, 2
    %v4 = vld [vmem:[%s0] sm:%s3]
    %5 = vst [vmem:[#allocation0] sm:%s3] %v4
    %v6 = vld [vmem:[#allocation0] sm:$0x3]
    %vm7 = vcmask 7168
    %8 = vst.msk [vmem:[%s1] ss:$16 sm:$0x3] %vm7, %v6
    %v9 = vld [vmem:[#allocation0] sm:$0x3]
    %10 = vrot.lane.b32.xlu0 %v9, 127
    %v11 = vpop.permute.xlu0 %10
    %vm12 = vcmask 7168
    %s13 = scalar_lea.vmem %s1, 1
    %14 = vst.msk [vmem:[%s13] ss:$16 sm:$0x3] %vm12, %v11
    %v15 = vld [vmem:[#allocation0] sm:$0x3]
    %16 = vrot.lane.b32.xlu0 %v15, 126
    %v17 = vpop.permute.xlu0 %16
    %vm18 = vcmask 7168
    %s19 = scalar_lea.vmem %s1, 2
    %20 = vst.msk [vmem:[%s19] ss:$16 sm:$0x3] %vm18, %v17
    %v21 = vld [vmem:[#allocation0] sm:$0x3]
    %22 = vrot.lane.b32.xlu0 %v21, 125
    %v23 = vpop.permute.xlu0 %22
    %vm24 = vcmask 7168
    %s25 = scalar_lea.vmem %s1, 3
    %26 = vst.msk [vmem:[%s25] ss:$16 sm:$0x3] %vm24, %v23
    %v27 = vld [vmem:[#allocation0] sm:$0x3]
    %28 = vrot.lane.b32.xlu0 %v27, 124
    %v29 = vpop.permute.xlu0 %28
    %vm30 = vcmask 7168
    %s31 = scalar_lea.vmem %s1, 4
    %32 = vst.msk [vmem:[%s31] ss:$16 sm:$0x3] %vm30, %v29
    %v33 = vld [vmem:[#allocation0] sm:$0x3]
    %34 = vrot.lane.b32.xlu0 %v33, 123
    %v35 = vpop.permute.xlu0 %34
    %vm36 = vcmask 7168
    %s37 = scalar_lea.vmem %s1, 5
    %38 = vst.msk [vmem:[%s37] ss:$16 sm:$0x3] %vm36, %v35
    %v39 = vld [vmem:[#allocation0] sm:$0x3]
    %40 = vrot.lane.b32.xlu0 %v39, 122
    %v41 = vpop.permute.xlu0 %40
    %vm42 = vcmask 7168
    %s43 = scalar_lea.vmem %s1, 6
    %44 = vst.msk [vmem:[%s43] ss:$16 sm:$0x3] %vm42, %v41
    %v45 = vld [vmem:[#allocation0] sm:$0x3]
    %46 = vrot.lane.b32.xlu0 %v45, 121
    %v47 = vpop.permute.xlu0 %46
    %vm48 = vcmask 7168
    %s49 = scalar_lea.vmem %s1, 7
    %50 = vst.msk [vmem:[%s49] ss:$16 sm:$0x3] %vm48, %v47
    %v51 = vld [vmem:[#allocation0] sm:$0x3]
    %52 = vrot.lane.b32.xlu0 %v51, 120
    %v53 = vpop.permute.xlu0 %52
    %vm54 = vcmask 7168
    %s55 = scalar_lea.vmem %s1, 8
    %56 = vst.msk [vmem:[%s55] ss:$16 sm:$0x3] %vm54, %v53
    %v57 = vld [vmem:[#allocation0] sm:$0x3]
    %58 = vrot.lane.b32.xlu0 %v57, 119
    %v59 = vpop.permute.xlu0 %58
    %vm60 = vcmask 7168
    %s61 = scalar_lea.vmem %s1, 9
    %62 = vst.msk [vmem:[%s61] ss:$16 sm:$0x3] %vm60, %v59
    %v63 = vld [vmem:[#allocation0] sm:$0x3]
    %64 = vrot.lane.b32.xlu0 %v63, 118
    %v65 = vpop.permute.xlu0 %64
    %vm66 = vcmask 7168
    %s67 = scalar_lea.vmem %s1, 10
    %68 = vst.msk [vmem:[%s67] ss:$16 sm:$0x3] %vm66, %v65
    %v69 = vld [vmem:[#allocation0] sm:$0x3]
    %70 = vrot.lane.b32.xlu0 %v69, 117
    %v71 = vpop.permute.xlu0 %70
    %vm72 = vcmask 7168
    %s73 = scalar_lea.vmem %s1, 11
    %74 = vst.msk [vmem:[%s73] ss:$16 sm:$0x3] %vm72, %v71
    %v75 = vld [vmem:[#allocation0] sm:$0x3]
    %76 = vrot.lane.b32.xlu0 %v75, 116
    %v77 = vpop.permute.xlu0 %76
    %vm78 = vcmask 7168
    %s79 = scalar_lea.vmem %s1, 12
    %80 = vst.msk [vmem:[%s79] ss:$16 sm:$0x3] %vm78, %v77
    %v81 = vld [vmem:[#allocation0] sm:$0x3]
    %82 = vrot.lane.b32.xlu0 %v81, 115
    %v83 = vpop.permute.xlu0 %82
    %vm84 = vcmask 7168
    %s85 = scalar_lea.vmem %s1, 13
    %86 = vst.msk [vmem:[%s85] ss:$16 sm:$0x3] %vm84, %v83
    %v87 = vld [vmem:[#allocation0] sm:$0x3]
    %88 = vrot.lane.b32.xlu0 %v87, 114
    %v89 = vpop.permute.xlu0 %88
    %vm90 = vcmask 7168
    %s91 = scalar_lea.vmem %s1, 14
    %92 = vst.msk [vmem:[%s91] ss:$16 sm:$0x3] %vm90, %v89
    %v93 = vld [vmem:[#allocation0] sm:$0x3]
    %94 = vrot.lane.b32.xlu0 %v93, 113
    %v95 = vpop.permute.xlu0 %94
    %vm96 = vcmask 7168
    %s97 = scalar_lea.vmem %s1, 15
    %98 = vst.msk [vmem:[%s97] ss:$16 sm:$0x3] %vm96, %v95

// kernel: encoder_forward.1
$region0: #{encoder_forward.1}
  #allocation0 [shape = 'u32[]', space=smem, size = 0x4, offset = 0x4, fixed_abs, tag = 'smem constant byte address 0x4 - core index']
  #allocation1 [shape = 'u32[144,128]{1,0:T(1,128)}', space=vmem, size = 0x12000, scoped, tag = 'internal scratch']
  #allocation2 [shape = 'f32[2,24,32]{2,1,0:T(8,128)}', space=vmem, size = 0x6000, scoped, tag = 'scratch operand']
  %s0 = inlined_call_operand.vmem [shape: s32[32,1], index: 0, kind: input, shape index: {}]
  %s1 = inlined_call_operand.vmem [shape: f32[50,32], index: 1, kind: input, shape index: {}]
  %s2 = inlined_call_operand.vmem [shape: f32[1,32], index: 2, kind: input, shape index: {}]
  %s3 = inlined_call_operand.vmem [shape: f32[5,32,32], index: 3, kind: input, shape index: {}]
  %s4 = inlined_call_operand.hbm [shape: f32[1,32], index: 4, kind: input, shape index: {}]
  %s5 = inlined_call_operand.hbm [shape: f32[5,32,32], index: 5, kind: input, shape index: {}]
  %s6 = inlined_call_operand.hbm [shape: f32[1,32], index: 6, kind: input, shape index: {}]
  %s7 = inlined_call_operand.vmem [shape: f32[32,32], index: 7, kind: input, shape index: {}]
  %s8 = inlined_call_operand.hbm [shape: f32[1,32], index: 8, kind: input, shape index: {}]
  %s9 = inlined_call_operand.vmem [shape: f32[32,4], index: 9, kind: input, shape index: {}]
  %s10 = inlined_call_operand.hbm [shape: f32[1,4], index: 10, kind: input, shape index: {}]
  %s11 = inlined_call_operand.hbm [shape: f32[2,4], index: 11, kind: output, shape index: {0}]
  %s12 = inlined_call_operand.hbm [shape: f32[2,32], index: 12, kind: output, shape index: {1}]
  %13 = xla_tuple %s11, %s12
  %s14 = sld [smem:[#allocation0]]
  $region82: #{encoder_forward.1} parent=0
    _
  %s16 = ssub.s32 1, %s14
  %s17 = scalar_select 0, %s16, %s14
  $region1: #{encoder_forward.1} parent=0
    #allocation3 [shape = 'u8[512]{0}', space=vmem, size = 0x400, scoped, tag = 'input window, operand 4, single buffered']
    #allocation4 [shape = 's32[1]{0}', space=sflag, size = 0x4, scoped, tag = 'scoped memory for encoder_forward.1']
    #allocation5 [shape = 's32[1]{0}', space=sflag, size = 0x4, scoped, tag = 'scoped memory for encoder_forward.1']
    #allocation6 [shape = 'u8[81920]{0}', space=vmem, size = 0x14000, scoped, tag = 'input window, operand 5, single buffered']
    #allocation7 [shape = 's32[1]{0}', space=sflag, size = 0x4, scoped, tag = 'scoped memory for encoder_forward.1']
    #allocation8 [shape = 'u8[512]{0}', space=vmem, size = 0x400, scoped, tag = 'input window, operand 6, single buffered']
    #allocation9 [shape = 'u8[512]{0}', space=vmem, size = 0x400, scoped, tag = 'input window, operand 8, single buffered']
    #allocation10 [shape = 's32[1]{0}', space=sflag, size = 0x4, scoped, tag = 'scoped memory for encoder_forward.1']
    #allocation11 [shape = 'u8[512]{0}', space=vmem, size = 0x400, scoped, tag = 'input window, operand 10, single buffered']
    #allocation12 [shape = 'u8[1024]{0}', space=vmem, size = 0x400, scoped, tag = 'output window, operand 0, single buffered']
    #allocation13 [shape = 'u8[1024]{0}', space=vmem, size = 0x400, scoped, tag = 'output window, operand 1, single buffered']
    #allocation14 [shape = 's32[1]{0}', space=sflag, size = 0x4, scoped, tag = 'scoped memory for encoder_forward.1']
    %18 = vsyncpa [#allocation4], 0
    %19 = vsyncpa [#allocation7], 0
    %20 = vsyncpa [#allocation10], 0
    %21 = vsyncpa [#allocation5], 0
    %22 = vsyncpa [#allocation14], 0
    // Predicated region
    $region2: #{encoder_forward.1} parent=1 // pred_check
      _
    $region3: #{encoder_forward.1} parent=1 // pred_check_branch
      %24 = sbr.rel (0) target = $region5
    $region4: #{encoder_forward.1} parent=1 // pred_region
      _
    $region5: #{encoder_forward.1} parent=1 // pred_fallthru
      _
    // Predicated region
    $region6: #{encoder_forward.1} parent=1 // pred_check
      _
    $region7: #{encoder_forward.1} parent=1 // pred_check_branch
      %26 = sbr.rel (0) target = $region9
    $region8: #{encoder_forward.1} parent=1 // pred_region
      _
    $region9: #{encoder_forward.1} parent=1 // pred_fallthru
      _
    // Predicated region
    $region10: #{encoder_forward.1} parent=1 // pred_check
      _
    $region11: #{encoder_forward.1} parent=1 // pred_check_branch
      %28 = sbr.rel (0) target = $region13
    $region12: #{encoder_forward.1} parent=1 // pred_region
      _
    $region13: #{encoder_forward.1} parent=1 // pred_fallthru
      _
    // Predicated region
    $region14: #{encoder_forward.1} parent=1 // pred_check
      _
    $region15: #{encoder_forward.1} parent=1 // pred_check_branch
      %30 = sbr.rel (0) target = $region17
    $region16: #{encoder_forward.1} parent=1 // pred_region
      _
    $region17: #{encoder_forward.1} parent=1 // pred_fallthru
      _
    // Predicated region
    $region18: #{encoder_forward.1} parent=1 // pred_check
      _
    $region19: #{encoder_forward.1} parent=1 // pred_check_branch
      %32 = sbr.rel (0) target = $region21
    $region20: #{encoder_forward.1} parent=1 // pred_region
      %s34 = ssub.s32 16, 16
      %35 = vsyncadd [#allocation4], %s34
      %s37 = sshll.u32 [#allocation3], 4
      %s38 = int_to_ptr.vmem [resolvable:$true] %s37
      %40 = dma.hbm_to_vmem [thread:$0]  %s4, 16, %s38, [#allocation4]
    $region21: #{encoder_forward.1} parent=1 // pred_fallthru
      _
    // Predicated region
    $region22: #{encoder_forward.1} parent=1 // pred_check
      _
    $region23: #{encoder_forward.1} parent=1 // pred_check_branch
      %42 = sbr.rel (0) target = $region25
    $region24: #{encoder_forward.1} parent=1 // pred_region
      %s44 = ssub.s32 2560, 2560
      %45 = vsyncadd [#allocation7], %s44
      %s46 = sshll.u32 [#allocation6], 4
      %s47 = int_to_ptr.vmem [resolvable:$true] %s46
      %52 = dma.hbm_to_vmem [thread:$0]  %s5, 2560, %s47, [#allocation7], 128, 128, 8
    $region25: #{encoder_forward.1} parent=1 // pred_fallthru
      _
    // Predicated region
    $region26: #{encoder_forward.1} parent=1 // pred_check
      _
    $region27: #{encoder_forward.1} parent=1 // pred_check_branch
      %54 = sbr.rel (0) target = $region29
    $region28: #{encoder_forward.1} parent=1 // pred_region
      %s56 = ssub.s32 16, 16
      %57 = vsyncadd [#allocation7], %s56
      %s59 = sshll.u32 [#allocation8], 4
      %s60 = int_to_ptr.vmem [resolvable:$true] %s59
      %62 = dma.hbm_to_vmem [thread:$0]  %s6, 16, %s60, [#allocation7]
    $region29: #{encoder_forward.1} parent=1 // pred_fallthru
      _
    // Predicated region
    $region30: #{encoder_forward.1} parent=1 // pred_check
      _
    $region31: #{encoder_forward.1} parent=1 // pred_check_branch
      %64 = sbr.rel (0) target = $region33
    $region32: #{encoder_forward.1} parent=1 // pred_region
      _
    $region33: #{encoder_forward.1} parent=1 // pred_fallthru
      _
    // Predicated region
    $region34: #{encoder_forward.1} parent=1 // pred_check
      _
    $region35: #{encoder_forward.1} parent=1 // pred_check_branch
      %66 = sbr.rel (0) target = $region37
    $region36: #{encoder_forward.1} parent=1 // pred_region
      %s68 = ssub.s32 16, 16
      %69 = vsyncadd [#allocation10], %s68
      %s71 = sshll.u32 [#allocation9], 4
      %s72 = int_to_ptr.vmem [resolvable:$true] %s71
      %74 = dma.hbm_to_vmem [thread:$0]  %s8, 16, %s72, [#allocation10]
    $region37: #{encoder_forward.1} parent=1 // pred_fallthru
      _
    // Predicated region
    $region38: #{encoder_forward.1} parent=1 // pred_check
      _
    $region39: #{encoder_forward.1} parent=1 // pred_check_branch
      %76 = sbr.rel (0) target = $region41
    $region40: #{encoder_forward.1} parent=1 // pred_region
      _
    $region41: #{encoder_forward.1} parent=1 // pred_fallthru
      _
    // Predicated region
    $region42: #{encoder_forward.1} parent=1 // pred_check
      _
    $region43: #{encoder_forward.1} parent=1 // pred_check_branch
      %78 = sbr.rel (0) target = $region45
    $region44: #{encoder_forward.1} parent=1 // pred_region
      %s80 = ssub.s32 16, 16
      %81 = vsyncadd [#allocation10], %s80
      %s83 = sshll.u32 [#allocation11], 4
      %s84 = int_to_ptr.vmem [resolvable:$true] %s83
      %86 = dma.hbm_to_vmem [thread:$0]  %s10, 16, %s84, [#allocation10]
    $region45: #{encoder_forward.1} parent=1 // pred_fallthru
      _
    // Predicated region
    $region46: #{encoder_forward.1} parent=1 // pred_check
      _
    $region47: #{encoder_forward.1} parent=1 // pred_check_branch
      %88 = sbr.rel (0) target = $region49
    $region48: #{encoder_forward.1} parent=1 // pred_region
      %89 = dma.done [#allocation4], 16
    $region49: #{encoder_forward.1} parent=1 // pred_fallthru
      _
    // Predicated region
    $region50: #{encoder_forward.1} parent=1 // pred_check
      _
    $region51: #{encoder_forward.1} parent=1 // pred_check_branch
      %91 = sbr.rel (0) target = $region53
    $region52: #{encoder_forward.1} parent=1 // pred_region
      %92 = dma.done [#allocation7], 2560
    $region53: #{encoder_forward.1} parent=1 // pred_fallthru
      _
    // Predicated region
    $region54: #{encoder_forward.1} parent=1 // pred_check
      _
    $region55: #{encoder_forward.1} parent=1 // pred_check_branch
      %94 = sbr.rel (0) target = $region57
    $region56: #{encoder_forward.1} parent=1 // pred_region
      %95 = dma.done [#allocation7], 16
    $region57: #{encoder_forward.1} parent=1 // pred_fallthru
      _
    // Predicated region
    $region58: #{encoder_forward.1} parent=1 // pred_check
      _
    $region59: #{encoder_forward.1} parent=1 // pred_check_branch
      %97 = sbr.rel (0) target = $region61
    $region60: #{encoder_forward.1} parent=1 // pred_region
      %98 = dma.done [#allocation10], 16
    $region61: #{encoder_forward.1} parent=1 // pred_fallthru
      _
    // Predicated region
    $region62: #{encoder_forward.1} parent=1 // pred_check
      _
    $region63: #{encoder_forward.1} parent=1 // pred_check_branch
      %100 = sbr.rel (0) target = $region65
    $region64: #{encoder_forward.1} parent=1 // pred_region
      %101 = dma.done [#allocation10], 16
    $region65: #{encoder_forward.1} parent=1 // pred_fallthru
      _
    %v102 = vld [vmem:[%s0] sm:$0xff]
    %v103 = vld [vmem:[%s0 + $0x8] sm:$0xff]
    %v104 = vld [vmem:[%s0 + $0x10] sm:$0xff]
    %v105 = vld [vmem:[%s0 + $0x18] sm:$0xff]
    %v106 = vlaneseq
    %v107 = vand.u32 %v106, 127
    %108 = vset.pattern.permute.xlu0 0
    %109 = vperm.xlu0 %108, %v102
    %v110 = vpop.permute.xlu0 %109
    %111 = vset.pattern.permute.xlu0 0
    %112 = vperm.xlu0 %111, %v103
    %v113 = vpop.permute.xlu0 %112
    %114 = vset.pattern.permute.xlu0 0
    %115 = vperm.xlu0 %114, %v104
    %v116 = vpop.permute.xlu0 %115
    %117 = vset.pattern.permute.xlu0 0
    %118 = vperm.xlu0 %117, %v105
    %v119 = vpop.permute.xlu0 %118
    %vm120 = vcmp.eq.s32.totalorder %v107, %v110
    %vm121 = vcmp.eq.s32.totalorder %v107, %v113
    %vm122 = vcmp.eq.s32.totalorder %v107, %v116
    %vm123 = vcmp.eq.s32.totalorder %v107, %v119
    %v124 = vsel %vm120, 1, 0
    %v125 = vsel %vm121, 1, 0
    %v126 = vsel %vm122, 1, 0
    %v127 = vsel %vm123, 1, 0
    %v128 = vcvt.s32.f32 %v124
    %v129 = vcvt.s32.f32 %v125
    %v130 = vcvt.s32.f32 %v126
    %v131 = vcvt.s32.f32 %v127
    %v132 = vld [vmem:[%s1] sm:$0xff]
    %v133 = vld [vmem:[%s1 + $0x8] sm:$0xff]
    %v134 = vld [vmem:[%s1 + $0x10] sm:$0xff]
    %v135 = vld [vmem:[%s1 + $0x18] sm:$0xff]
    %v136 = vld [vmem:[%s1 + $0x20] sm:$0xff]
    %v137 = vld [vmem:[%s1 + $0x28] sm:$0xff]
    %v138 = vld [vmem:[%s1 + $0x30] sm:$0x3]
    %v139 = vld [vmem:[%s2] sm:$0x1]
    %v141 = vlaneseq
    %v142 = vshrl.u32 %v141, 7
    %v143 = vsub.s32 0, %v142
    %v144 = vrot.slane %v139, %v143
    %vm146 = vcmask 408576
    %v148 = vsel %vm146, %v128, 0
    %v151 = vsel %vm146, %v129, 0
    %v154 = vsel %vm146, %v130, 0
    %v157 = vsel %vm146, %v131, 0
    %vm159 = vcmask 1041408
    %v161 = vsel %vm159, %v138, 0
    %163 = vmatprep.subr.mxu0 0.0
    %164 = vmatpush1.msra.mxu0 %v132
    %165 = vmatprep.subr.mxu0 0.0
    %166 = vmatpush1.msra.mxu0 %v133
    %167 = vmatprep.subr.mxu0 0.0
    %168 = vmatpush1.msra.mxu0 %v134
    %169 = vmatprep.subr.mxu0 0.0
    %170 = vmatpush1.msra.mxu0 %v135
    %171 = vmatprep.subr.mxu0 0.0
    %172 = vmatpush1.msra.mxu0 %v136
    %173 = vmatprep.subr.mxu0 0.0
    %174 = vmatpush1.msra.mxu0 %v137
    %175 = vmatprep.subr.mxu0 0.0
    %176 = vmatpush1.msra.mxu0 %v161
    %177 = vmatprep.subr.mxu0 0.0
    %178 = vmatpush1.msra.mxu0 0.0
    %179 = vmatprep.subr.mxu0 0.0
    %180 = vmatpush1.msra.mxu0 0.0
    %181 = vmatprep.subr.mxu0 0.0
    %182 = vmatpush1.msra.mxu0 0.0
    %183 = vmatprep.subr.mxu0 0.0
    %184 = vmatpush1.msra.mxu0 0.0
    %185 = vmatprep.subr.mxu0 0.0
    %186 = vmatpush1.msra.mxu0 0.0
    %187 = vmatprep.subr.mxu0 0.0
    %188 = vmatpush1.msra.mxu0 0.0
    %189 = vmatprep.subr.mxu0 0.0
    %190 = vmatpush1.msra.mxu0 0.0
    %191 = vmatprep.subr.mxu0 0.0
    %192 = vmatpush1.msra.mxu0 0.0
    %193 = vmatprep.subr.mxu0 0.0
    %194 = vmatpush1.msra.mxu0 0.0
    %195 = vmatprep.subr.mxu0 0.0
    %196 = vmatpush1.msra.mxu0 0.0
    %197 = vmatprep.subr.mxu0 0.0
    %198 = vmatpush1.msra.mxu0 0.0
    %199 = vmatprep.subr.mxu0 0.0
    %200 = vmatpush1.msra.mxu0 0.0
    %201 = vmatprep.subr.mxu0 0.0
    %202 = vmatpush1.msra.mxu0 0.0
    %203 = vmatprep.subr.mxu0 0.0
    %204 = vmatpush1.msra.mxu0 0.0
    %205 = vmatprep.subr.mxu0 0.0
    %206 = vmatpush1.msra.mxu0 0.0
    %207 = vmatprep.subr.mxu0 0.0
    %208 = vmatpush1.msra.mxu0 0.0
    %209 = vmatprep.subr.mxu0 0.0
    %210 = vmatpush1.msra.mxu0 0.0
    %211 = vmatprep.subr.mxu0 0.0
    %212 = vmatpush1.msra.mxu0 0.0
    %213 = vmatprep.subr.mxu0 0.0
    %214 = vmatpush1.msra.mxu0 0.0
    %215 = vmatprep.subr.mxu0 0.0
    %216 = vmatpush1.msra.mxu0 0.0
    %217 = vmatprep.subr.mxu0 0.0
    %218 = vmatpush1.msra.mxu0 0.0
    %219 = vmatprep.subr.mxu0 0.0
    %220 = vmatpush1.msra.mxu0 0.0
    %221 = vmatprep.subr.mxu0 0.0
    %222 = vmatpush1.msra.mxu0 0.0
    %223 = vmatprep.subr.mxu0 0.0
    %224 = vmatpush1.msra.mxu0 0.0
    %225 = vmatprep.subr.mxu0 0.0
    %226 = vmatpush1.msra.mxu0 0.0
    %227 = vmatprep.mubr.f32.mxu0 0.0
    %228 = vmatmul.mubr.f32.gmra.mrb[0].mxu0 %v148
    %v229 = vpop.f32.mrb[0].mxu0
    %v230 = vadd.f32 %v144, %v229
    %v231 = vpop.f32.mrb[0].mxu0
    %232 = vmatprep.mubr.f32.mxu0 0.0
    %233 = vmatmul.mubr.f32.gmra.mrb[0].mxu0 %v151
    %v234 = vpop.f32.mrb[0].mxu0
    %v235 = vadd.f32 %v144, %v234
    %v236 = vpop.f32.mrb[0].mxu0
    %237 = vmatprep.mubr.f32.mxu0 0.0
    %238 = vmatmul.mubr.f32.gmra.mrb[0].mxu0 %v154
    %v239 = vpop.f32.mrb[0].mxu0
    %v240 = vadd.f32 %v144, %v239
    %v241 = vpop.f32.mrb[0].mxu0
    %242 = vmatprep.mubr.f32.mxu0 0.0
    %243 = vmatmul.mubr.f32.gmra.mrb[0].mxu0 %v157
    %v244 = vpop.f32.mrb[0].mxu0
    %v245 = vadd.f32 %v144, %v244
    %v246 = vpop.f32.mrb[0].mxu0
    %247 = vdwg.mxu0
    %v248 = vmax.f32 %v230, 0.0
    %v249 = vmax.f32 %v235, 0.0
    %v250 = vmax.f32 %v240, 0.0
    %v251 = vmax.f32 %v245, 0.0
    %vm252 = vcmask 261120
    %253 = vst.msk [vmem:[#allocation2] sm:$0xff] %vm252, 0.0
    %254 = vst.msk [vmem:[#allocation2 + $0x8] sm:$0xff] %vm252, 0.0
    %255 = vst.msk [vmem:[#allocation2 + $0x10] sm:$0xff] %vm252, 0.0
    %256 = vst.msk [vmem:[#allocation2 + $0x18] sm:$0xff] %vm252, 0.0
    %257 = vst.msk [vmem:[#allocation2 + $0x20] sm:$0xff] %vm252, 0.0
    %258 = vst.msk [vmem:[#allocation2 + $0x28] sm:$0xff] %vm252, 0.0
    %259 = vst.msk [vmem:[#allocation2 + $0x8] sm:$0xff] %vm252, %v248
    %260 = vst.msk [vmem:[#allocation2 + $0x10] sm:$0xff] %vm252, %v249
    %261 = vst.msk [vmem:[#allocation2 + $0x20] sm:$0xff] %vm252, %v250
    %262 = vst.msk [vmem:[#allocation2 + $0x28] sm:$0xff] %vm252, %v251
    %v263 = vld [vmem:[#allocation2 + $0x4] sm:$0xff]
    %v264 = vld [vmem:[#allocation2 + $0xc] sm:$0xff]
    %v265 = vld [vmem:[#allocation2 + $0x1c] sm:$0xff]
    %v266 = vld [vmem:[#allocation2 + $0x24] sm:$0xff]
    %v267 = vld [vmem:[%s3] sm:$0xff]
    %v268 = vld [vmem:[%s3 + $0x8] sm:$0xff]
    %v269 = vld [vmem:[%s3 + $0x10] sm:$0xff]
    %v270 = vld [vmem:[%s3 + $0x18] sm:$0xff]
    %v271 = vld [vmem:[#allocation2 + $0x5] sm:$0xff]
    %v272 = vld [vmem:[#allocation2 + $0xd] sm:$0xff]
    %v273 = vld [vmem:[#allocation2 + $0x1d] sm:$0xff]
    %v274 = vld [vmem:[#allocation2 + $0x25] sm:$0xff]
    %s275 = scalar_lea.vmem %s3, 32
    %v276 = vld [vmem:[%s275] sm:$0xff]
    %v277 = vld [vmem:[%s275 + $0x8] sm:$0xff]
    %v278 = vld [vmem:[%s275 + $0x10] sm:$0xff]
    %v279 = vld [vmem:[%s275 + $0x18] sm:$0xff]
    %v281 = vsel %vm252, %v271, 0
    %v284 = vsel %vm252, %v272, 0
    %v287 = vsel %vm252, %v273, 0
    %v290 = vsel %vm252, %v274, 0
    %292 = vmatprep.subr.mxu0 0.0
    %293 = vmatpush1.msra.mxu0 %v276
    %294 = vmatprep.subr.mxu0 0.0
    %295 = vmatpush1.msra.mxu0 %v277
    %296 = vmatprep.subr.mxu0 0.0
    %297 = vmatpush1.msra.mxu0 %v278
    %298 = vmatprep.subr.mxu0 0.0
    %299 = vmatpush1.msra.mxu0 %v279
    %300 = vmatprep.subr.mxu0 0.0
    %301 = vmatpush1.msra.mxu0 0.0
    %302 = vmatprep.subr.mxu0 0.0
    %303 = vmatpush1.msra.mxu0 0.0
    %304 = vmatprep.subr.mxu0 0.0
    %305 = vmatpush1.msra.mxu0 0.0
    %306 = vmatprep.subr.mxu0 0.0
    %307 = vmatpush1.msra.mxu0 0.0
    %308 = vmatprep.subr.mxu0 0.0
    %309 = vmatpush1.msra.mxu0 0.0
    %310 = vmatprep.subr.mxu0 0.0
    %311 = vmatpush1.msra.mxu0 0.0
    %312 = vmatprep.subr.mxu0 0.0
    %313 = vmatpush1.msra.mxu0 0.0
    %314 = vmatprep.subr.mxu0 0.0
    %315 = vmatpush1.msra.mxu0 0.0
    %316 = vmatprep.subr.mxu0 0.0
    %317 = vmatpush1.msra.mxu0 0.0
    %318 = vmatprep.subr.mxu0 0.0
    %319 = vmatpush1.msra.mxu0 0.0
    %320 = vmatprep.subr.mxu0 0.0
    %321 = vmatpush1.msra.mxu0 0.0
    %322 = vmatprep.subr.mxu0 0.0
    %323 = vmatpush1.msra.mxu0 0.0
    %324 = vmatprep.subr.mxu0 0.0
    %325 = vmatpush1.msra.mxu0 0.0
    %326 = vmatprep.subr.mxu0 0.0
    %327 = vmatpush1.msra.mxu0 0.0
    %328 = vmatprep.subr.mxu0 0.0
    %329 = vmatpush1.msra.mxu0 0.0
    %330 = vmatprep.subr.mxu0 0.0
    %331 = vmatpush1.msra.mxu0 0.0
    %332 = vmatprep.subr.mxu0 0.0
    %333 = vmatpush1.msra.mxu0 0.0
    %334 = vmatprep.subr.mxu0 0.0
    %335 = vmatpush1.msra.mxu0 0.0
    %336 = vmatprep.subr.mxu0 0.0
    %337 = vmatpush1.msra.mxu0 0.0
    %338 = vmatprep.subr.mxu0 0.0
    %339 = vmatpush1.msra.mxu0 0.0
    %340 = vmatprep.subr.mxu0 0.0
    %341 = vmatpush1.msra.mxu0 0.0
    %342 = vmatprep.subr.mxu0 0.0
    %343 = vmatpush1.msra.mxu0 0.0
    %344 = vmatprep.subr.mxu0 0.0
    %345 = vmatpush1.msra.mxu0 0.0
    %346 = vmatprep.subr.mxu0 0.0
    %347 = vmatpush1.msra.mxu0 0.0
    %348 = vmatprep.subr.mxu0 0.0
    %349 = vmatpush1.msra.mxu0 0.0
    %350 = vmatprep.subr.mxu0 0.0
    %351 = vmatpush1.msra.mxu0 0.0
    %352 = vmatprep.subr.mxu0 0.0
    %353 = vmatpush1.msra.mxu0 0.0
    %354 = vmatprep.subr.mxu0 0.0
    %355 = vmatpush1.msra.mxu0 0.0
    %356 = vmatprep.mubr.f32.mxu0 0.0
    %357 = vmatmul.mubr.f32.gmra.mrb[0].mxu0 %v281
    %v358 = vpop.f32.mrb[0].mxu0
    %v359 = vadd.f32 0.0, %v358
    %v360 = vpop.f32.mrb[0].mxu0
    %361 = vmatprep.mubr.f32.mxu0 0.0
    %362 = vmatmul.mubr.f32.gmra.mrb[0].mxu0 %v284
    %v363 = vpop.f32.mrb[0].mxu0
    %v364 = vadd.f32 0.0, %v363
    %v365 = vpop.f32.mrb[0].mxu0
    %366 = vmatprep.mubr.f32.mxu0 0.0
    %367 = vmatmul.mubr.f32.gmra.mrb[0].mxu0 %v287
    %v368 = vpop.f32.mrb[0].mxu0
    %v369 = vadd.f32 0.0, %v368
    %v370 = vpop.f32.mrb[0].mxu0
    %371 = vmatprep.mubr.f32.mxu0 0.0
    %372 = vmatmul.mubr.f32.gmra.mrb[0].mxu0 %v290
    %v373 = vpop.f32.mrb[0].mxu0
    %v374 = vadd.f32 0.0, %v373
    %v375 = vpop.f32.mrb[0].mxu0
    %376 = vdwg.mxu0
    %v378 = vsel %vm252, %v263, 0
    %v381 = vsel %vm252, %v264, 0
    %v384 = vsel %vm252, %v265, 0
    %v387 = vsel %vm252, %v266, 0
    %389 = vmatprep.subr.mxu0 0.0
    %390 = vmatpush1.msra.mxu0 %v267
    %391 = vmatprep.subr.mxu0 0.0
    %392 = vmatpush1.msra.mxu0 %v268
    %393 = vmatprep.subr.mxu0 0.0
    %394 = vmatpush1.msra.mxu0 %v269
    %395 = vmatprep.subr.mxu0 0.0
    %396 = vmatpush1.msra.mxu0 %v270
    %397 = vmatprep.subr.mxu0 0.0
    %398 = vmatpush1.msra.mxu0 0.0
    %399 = vmatprep.subr.mxu0 0.0
    %400 = vmatpush1.msra.mxu0 0.0
    %401 = vmatprep.subr.mxu0 0.0
    %402 = vmatpush1.msra.mxu0 0.0
    %403 = vmatprep.subr.mxu0 0.0
    %404 = vmatpush1.msra.mxu0 0.0
    %405 = vmatprep.subr.mxu0 0.0
    %406 = vmatpush1.msra.mxu0 0.0
    %407 = vmatprep.subr.mxu0 0.0
    %408 = vmatpush1.msra.mxu0 0.0
    %409 = vmatprep.subr.mxu0 0.0
    %410 = vmatpush1.msra.mxu0 0.0
    %411 = vmatprep.subr.mxu0 0.0
    %412 = vmatpush1.msra.mxu0 0.0
    %413 = vmatprep.subr.mxu0 0.0
    %414 = vmatpush1.msra.mxu0 0.0
    %415 = vmatprep.subr.mxu0 0.0
    %416 = vmatpush1.msra.mxu0 0.0
    %417 = vmatprep.subr.mxu0 0.0
    %418 = vmatpush1.msra.mxu0 0.0
    %419 = vmatprep.subr.mxu0 0.0
    %420 = vmatpush1.msra.mxu0 0.0
    %421 = vmatprep.subr.mxu0 0.0
    %422 = vmatpush1.msra.mxu0 0.0
    %423 = vmatprep.subr.mxu0 0.0
    %424 = vmatpush1.msra.mxu0 0.0
    %425 = vmatprep.subr.mxu0 0.0
    %426 = vmatpush1.msra.mxu0 0.0
    %427 = vmatprep.subr.mxu0 0.0
    %428 = vmatpush1.msra.mxu0 0.0
    %429 = vmatprep.subr.mxu0 0.0
    %430 = vmatpush1.msra.mxu0 0.0
    %431 = vmatprep.subr.mxu0 0.0
    %432 = vmatpush1.msra.mxu0 0.0
    %433 = vmatprep.subr.mxu0 0.0
    %434 = vmatpush1.msra.mxu0 0.0
    %435 = vmatprep.subr.mxu0 0.0
    %436 = vmatpush1.msra.mxu0 0.0
    %437 = vmatprep.subr.mxu0 0.0
    %438 = vmatpush1.msra.mxu0 0.0
    %439 = vmatprep.subr.mxu0 0.0
    %440 = vmatpush1.msra.mxu0 0.0
    %441 = vmatprep.subr.mxu0 0.0
    %442 = vmatpush1.msra.mxu0 0.0
    %443 = vmatprep.subr.mxu0 0.0
    %444 = vmatpush1.msra.mxu0 0.0
    %445 = vmatprep.subr.mxu0 0.0
    %446 = vmatpush1.msra.mxu0 0.0
    %447 = vmatprep.subr.mxu0 0.0
    %448 = vmatpush1.msra.mxu0 0.0
    %449 = vmatprep.subr.mxu0 0.0
    %450 = vmatpush1.msra.mxu0 0.0
    %451 = vmatprep.subr.mxu0 0.0
    %452 = vmatpush1.msra.mxu0 0.0
    %453 = vmatprep.mubr.f32.mxu0 0.0
    %454 = vmatmul.mubr.f32.gmra.mrb[0].mxu0 %v378
    %v455 = vpop.f32.mrb[0].mxu0
    %v456 = vadd.f32 %v359, %v455
    %v457 = vpop.f32.mrb[0].mxu0
    %458 = vmatprep.mubr.f32.mxu0 0.0
    %459 = vmatmul.mubr.f32.gmra.mrb[0].mxu0 %v381
    %v460 = vpop.f32.mrb[0].mxu0
    %v461 = vadd.f32 %v364, %v460
    %v462 = vpop.f32.mrb[0].mxu0
    %463 = vmatprep.mubr.f32.mxu0 0.0
    %464 = vmatmul.mubr.f32.gmra.mrb[0].mxu0 %v384
    %v465 = vpop.f32.mrb[0].mxu0
    %v466 = vadd.f32 %v369, %v465
    %v467 = vpop.f32.mrb[0].mxu0
    %468 = vmatprep.mubr.f32.mxu0 0.0
    %469 = vmatmul.mubr.f32.gmra.mrb[0].mxu0 %v387
    %v470 = vpop.f32.mrb[0].mxu0
    %v471 = vadd.f32 %v374, %v470
    %v472 = vpop.f32.mrb[0].mxu0
    %473 = vdwg.mxu0
    %v474 = vld [vmem:[#allocation2 + $0x6] sm:$0xff]
    %v475 = vld [vmem:[#allocation2 + $0xe] sm:$0xff]
    %v476 = vld [vmem:[#allocation2 + $0x1e] sm:$0xff]
    %v477 = vld [vmem:[#allocation2 + $0x26] sm:$0xff]
    %s478 = scalar_lea.vmem %s3, 64
    %v479 = vld [vmem:[%s478] sm:$0xff]
    %v480 = vld [vmem:[%s478 + $0x8] sm:$0xff]
    %v481 = vld [vmem:[%s478 + $0x10] sm:$0xff]
    %v482 = vld [vmem:[%s478 + $0x18] sm:$0xff]
    %v484 = vsel %vm252, %v474, 0
    %v487 = vsel %vm252, %v475, 0
    %v490 = vsel %vm252, %v476, 0
    %v493 = vsel %vm252, %v477, 0
    %495 = vmatprep.subr.mxu0 0.0
    %496 = vmatpush1.msra.mxu0 %v479
    %497 = vmatprep.subr.mxu0 0.0
    %498 = vmatpush1.msra.mxu0 %v480
    %499 = vmatprep.subr.mxu0 0.0
    %500 = vmatpush1.msra.mxu0 %v481
    %501 = vmatprep.subr.mxu0 0.0
    %502 = vmatpush1.msra.mxu0 %v482
    %503 = vmatprep.subr.mxu0 0.0
    %504 = vmatpush1.msra.mxu0 0.0
    %505 = vmatprep.subr.mxu0 0.0
    %506 = vmatpush1.msra.mxu0 0.0
    %507 = vmatprep.subr.mxu0 0.0
    %508 = vmatpush1.msra.mxu0 0.0
    %509 = vmatprep.subr.mxu0 0.0
    %510 = vmatpush1.msra.mxu0 0.0
    %511 = vmatprep.subr.mxu0 0.0
    %512 = vmatpush1.msra.mxu0 0.0
    %513 = vmatprep.subr.mxu0 0.0
    %514 = vmatpush1.msra.mxu0 0.0
    %515 = vmatprep.subr.mxu0 0.0
    %516 = vmatpush1.msra.mxu0 0.0
    %517 = vmatprep.subr.mxu0 0.0
    %518 = vmatpush1.msra.mxu0 0.0
    %519 = vmatprep.subr.mxu0 0.0
    %520 = vmatpush1.msra.mxu0 0.0
    %521 = vmatprep.subr.mxu0 0.0
    %522 = vmatpush1.msra.mxu0 0.0
    %523 = vmatprep.subr.mxu0 0.0
    %524 = vmatpush1.msra.mxu0 0.0
    %525 = vmatprep.subr.mxu0 0.0
    %526 = vmatpush1.msra.mxu0 0.0
    %527 = vmatprep.subr.mxu0 0.0
    %528 = vmatpush1.msra.mxu0 0.0
    %529 = vmatprep.subr.mxu0 0.0
    %530 = vmatpush1.msra.mxu0 0.0
    %531 = vmatprep.subr.mxu0 0.0
    %532 = vmatpush1.msra.mxu0 0.0
    %533 = vmatprep.subr.mxu0 0.0
    %534 = vmatpush1.msra.mxu0 0.0
    %535 = vmatprep.subr.mxu0 0.0
    %536 = vmatpush1.msra.mxu0 0.0
    %537 = vmatprep.subr.mxu0 0.0
    %538 = vmatpush1.msra.mxu0 0.0
    %539 = vmatprep.subr.mxu0 0.0
    %540 = vmatpush1.msra.mxu0 0.0
    %541 = vmatprep.subr.mxu0 0.0
    %542 = vmatpush1.msra.mxu0 0.0
    %543 = vmatprep.subr.mxu0 0.0
    %544 = vmatpush1.msra.mxu0 0.0
    %545 = vmatprep.subr.mxu0 0.0
    %546 = vmatpush1.msra.mxu0 0.0
    %547 = vmatprep.subr.mxu0 0.0
    %548 = vmatpush1.msra.mxu0 0.0
    %549 = vmatprep.subr.mxu0 0.0
    %550 = vmatpush1.msra.mxu0 0.0
    %551 = vmatprep.subr.mxu0 0.0
    %552 = vmatpush1.msra.mxu0 0.0
    %553 = vmatprep.subr.mxu0 0.0
    %554 = vmatpush1.msra.mxu0 0.0
    %555 = vmatprep.subr.mxu0 0.0
    %556 = vmatpush1.msra.mxu0 0.0
    %557 = vmatprep.subr.mxu0 0.0
    %558 = vmatpush1.msra.mxu0 0.0
    %559 = vmatprep.mubr.f32.mxu0 0.0
    %560 = vmatmul.mubr.f32.gmra.mrb[0].mxu0 %v484
    %v561 = vpop.f32.mrb[0].mxu0
    %v562 = vadd.f32 0.0, %v561
    %v563 = vpop.f32.mrb[0].mxu0
    %564 = vmatprep.mubr.f32.mxu0 0.0
    %565 = vmatmul.mubr.f32.gmra.mrb[0].mxu0 %v487
    %v566 = vpop.f32.mrb[0].mxu0
    %v567 = vadd.f32 0.0, %v566
    %v568 = vpop.f32.mrb[0].mxu0
    %569 = vmatprep.mubr.f32.mxu0 0.0
    %570 = vmatmul.mubr.f32.gmra.mrb[0].mxu0 %v490
    %v571 = vpop.f32.mrb[0].mxu0
    %v572 = vadd.f32 0.0, %v571
    %v573 = vpop.f32.mrb[0].mxu0
    %574 = vmatprep.mubr.f32.mxu0 0.0
    %575 = vmatmul.mubr.f32.gmra.mrb[0].mxu0 %v493
    %v576 = vpop.f32.mrb[0].mxu0
    %v577 = vadd.f32 0.0, %v576
    %v578 = vpop.f32.mrb[0].mxu0
    %579 = vdwg.mxu0
    %v580 = vadd.f32 %v456, %v562
    %v581 = vadd.f32 %v461, %v567
    %v582 = vadd.f32 %v466, %v572
    %v583 = vadd.f32 %v471, %v577
    %v584 = vld [vmem:[#allocation2 + $0x7] sm:$0xff]
    %v585 = vld [vmem:[#allocation2 + $0xf] sm:$0xff]
    %v586 = vld [vmem:[#allocation2 + $0x1f] sm:$0xff]
    %v587 = vld [vmem:[#allocation2 + $0x27] sm:$0xff]
    %s588 = scalar_lea.vmem %s3, 96
    %v589 = vld [vmem:[%s588] sm:$0xff]
    %v590 = vld [vmem:[%s588 + $0x8] sm:$0xff]
    %v591 = vld [vmem:[%s588 + $0x10] sm:$0xff]
    %v592 = vld [vmem:[%s588 + $0x18] sm:$0xff]
    %v594 = vsel %vm252, %v584, 0
    %v597 = vsel %vm252, %v585, 0
    %v600 = vsel %vm252, %v586, 0
    %v603 = vsel %vm252, %v587, 0
    %605 = vmatprep.subr.mxu0 0.0
    %606 = vmatpush1.msra.mxu0 %v589
    %607 = vmatprep.subr.mxu0 0.0
    %608 = vmatpush1.msra.mxu0 %v590
    %609 = vmatprep.subr.mxu0 0.0
    %610 = vmatpush1.msra.mxu0 %v591
    %611 = vmatprep.subr.mxu0 0.0
    %612 = vmatpush1.msra.mxu0 %v592
    %613 = vmatprep.subr.mxu0 0.0
    %614 = vmatpush1.msra.mxu0 0.0
    %615 = vmatprep.subr.mxu0 0.0
    %616 = vmatpush1.msra.mxu0 0.0
    %617 = vmatprep.subr.mxu0 0.0
    %618 = vmatpush1.msra.mxu0 0.0
    %619 = vmatprep.subr.mxu0 0.0
    %620 = vmatpush1.msra.mxu0 0.0
    %621 = vmatprep.subr.mxu0 0.0
    %622 = vmatpush1.msra.mxu0 0.0
    %623 = vmatprep.subr.mxu0 0.0
    %624 = vmatpush1.msra.mxu0 0.0
    %625 = vmatprep.subr.mxu0 0.0
    %626 = vmatpush1.msra.mxu0 0.0
    %627 = vmatprep.subr.mxu0 0.0
    %628 = vmatpush1.msra.mxu0 0.0
    %629 = vmatprep.subr.mxu0 0.0
    %630 = vmatpush1.msra.mxu0 0.0
    %631 = vmatprep.subr.mxu0 0.0
    %632 = vmatpush1.msra.mxu0 0.0
    %633 = vmatprep.subr.mxu0 0.0
    %634 = vmatpush1.msra.mxu0 0.0
    %635 = vmatprep.subr.mxu0 0.0
    %636 = vmatpush1.msra.mxu0 0.0
    %637 = vmatprep.subr.mxu0 0.0
    %638 = vmatpush1.msra.mxu0 0.0
    %639 = vmatprep.subr.mxu0 0.0
    %640 = vmatpush1.msra.mxu0 0.0
    %641 = vmatprep.subr.mxu0 0.0
    %642 = vmatpush1.msra.mxu0 0.0
    %643 = vmatprep.subr.mxu0 0.0
    %644 = vmatpush1.msra.mxu0 0.0
    %645 = vmatprep.subr.mxu0 0.0
    %646 = vmatpush1.msra.mxu0 0.0
    %647 = vmatprep.subr.mxu0 0.0
    %648 = vmatpush1.msra.mxu0 0.0
    %649 = vmatprep.subr.mxu0 0.0
    %650 = vmatpush1.msra.mxu0 0.0
    %651 = vmatprep.subr.mxu0 0.0
    %652 = vmatpush1.msra.mxu0 0.0
    %653 = vmatprep.subr.mxu0 0.0
    %654 = vmatpush1.msra.mxu0 0.0
    %655 = vmatprep.subr.mxu0 0.0
    %656 = vmatpush1.msra.mxu0 0.0
    %657 = vmatprep.subr.mxu0 0.0
    %658 = vmatpush1.msra.mxu0 0.0
    %659 = vmatprep.subr.mxu0 0.0
    %660 = vmatpush1.msra.mxu0 0.0
    %661 = vmatprep.subr.mxu0 0.0
    %662 = vmatpush1.msra.mxu0 0.0
    %663 = vmatprep.subr.mxu0 0.0
    %664 = vmatpush1.msra.mxu0 0.0
    %665 = vmatprep.subr.mxu0 0.0
    %666 = vmatpush1.msra.mxu0 0.0
    %667 = vmatprep.subr.mxu0 0.0
    %668 = vmatpush1.msra.mxu0 0.0
    %669 = vmatprep.mubr.f32.mxu0 0.0
    %670 = vmatmul.mubr.f32.gmra.mrb[0].mxu0 %v594
    %v671 = vpop.f32.mrb[0].mxu0
    %v672 = vadd.f32 0.0, %v671
    %v673 = vpop.f32.mrb[0].mxu0
    %674 = vmatprep.mubr.f32.mxu0 0.0
    %675 = vmatmul.mubr.f32.gmra.mrb[0].mxu0 %v597
    %v676 = vpop.f32.mrb[0].mxu0
    %v677 = vadd.f32 0.0, %v676
    %v678 = vpop.f32.mrb[0].mxu0
    %679 = vmatprep.mubr.f32.mxu0 0.0
    %680 = vmatmul.mubr.f32.gmra.mrb[0].mxu0 %v600
    %v681 = vpop.f32.mrb[0].mxu0
    %v682 = vadd.f32 0.0, %v681
    %v683 = vpop.f32.mrb[0].mxu0
    %684 = vmatprep.mubr.f32.mxu0 0.0
    %685 = vmatmul.mubr.f32.gmra.mrb[0].mxu0 %v603
    %v686 = vpop.f32.mrb[0].mxu0
    %v687 = vadd.f32 0.0, %v686
    %v688 = vpop.f32.mrb[0].mxu0
    %689 = vdwg.mxu0
    %v690 = vadd.f32 %v580, %v672
    %v691 = vadd.f32 %v581, %v677
    %v692 = vadd.f32 %v582, %v682
    %v693 = vadd.f32 %v583, %v687
    %v694 = vld [vmem:[#allocation2 + $0x8] sm:$0xff]
    %v695 = vld [vmem:[#allocation2 + $0x10] sm:$0xff]
    %v696 = vld [vmem:[#allocation2 + $0x20] sm:$0xff]
    %v697 = vld [vmem:[#allocation2 + $0x28] sm:$0xff]
    %s698 = scalar_lea.vmem %s3, 128
    %v699 = vld [vmem:[%s698] sm:$0xff]
    %v700 = vld [vmem:[%s698 + $0x8] sm:$0xff]
    %v701 = vld [vmem:[%s698 + $0x10] sm:$0xff]
    %v702 = vld [vmem:[%s698 + $0x18] sm:$0xff]
    %v704 = vsel %vm252, %v694, 0
    %v707 = vsel %vm252, %v695, 0
    %v710 = vsel %vm252, %v696, 0
    %v713 = vsel %vm252, %v697, 0
    %715 = vmatprep.subr.mxu0 0.0
    %716 = vmatpush1.msra.mxu0 %v699
    %717 = vmatprep.subr.mxu0 0.0
    %718 = vmatpush1.msra.mxu0 %v700
    %719 = vmatprep.subr.mxu0 0.0
    %720 = vmatpush1.msra.mxu0 %v701
    %721 = vmatprep.subr.mxu0 0.0
    %722 = vmatpush1.msra.mxu0 %v702
    %723 = vmatprep.subr.mxu0 0.0
    %724 = vmatpush1.msra.mxu0 0.0
    %725 = vmatprep.subr.mxu0 0.0
    %726 = vmatpush1.msra.mxu0 0.0
    %727 = vmatprep.subr.mxu0 0.0
    %728 = vmatpush1.msra.mxu0 0.0
    %729 = vmatprep.subr.mxu0 0.0
    %730 = vmatpush1.msra.mxu0 0.0
    %731 = vmatprep.subr.mxu0 0.0
    %732 = vmatpush1.msra.mxu0 0.0
    %733 = vmatprep.subr.mxu0 0.0
    %734 = vmatpush1.msra.mxu0 0.0
    %735 = vmatprep.subr.mxu0 0.0
    %736 = vmatpush1.msra.mxu0 0.0
    %737 = vmatprep.subr.mxu0 0.0
    %738 = vmatpush1.msra.mxu0 0.0
    %739 = vmatprep.subr.mxu0 0.0
    %740 = vmatpush1.msra.mxu0 0.0
    %741 = vmatprep.subr.mxu0 0.0
    %742 = vmatpush1.msra.mxu0 0.0
    %743 = vmatprep.subr.mxu0 0.0
    %744 = vmatpush1.msra.mxu0 0.0
    %745 = vmatprep.subr.mxu0 0.0
    %746 = vmatpush1.msra.mxu0 0.0
    %747 = vmatprep.subr.mxu0 0.0
    %748 = vmatpush1.msra.mxu0 0.0
    %749 = vmatprep.subr.mxu0 0.0
    %750 = vmatpush1.msra.mxu0 0.0
    %751 = vmatprep.subr.mxu0 0.0
    %752 = vmatpush1.msra.mxu0 0.0
    %753 = vmatprep.subr.mxu0 0.0
    %754 = vmatpush1.msra.mxu0 0.0
    %755 = vmatprep.subr.mxu0 0.0
    %756 = vmatpush1.msra.mxu0 0.0
    %757 = vmatprep.subr.mxu0 0.0
    %758 = vmatpush1.msra.mxu0 0.0
    %759 = vmatprep.subr.mxu0 0.0
    %760 = vmatpush1.msra.mxu0 0.0
    %761 = vmatprep.subr.mxu0 0.0
    %762 = vmatpush1.msra.mxu0 0.0
    %763 = vmatprep.subr.mxu0 0.0
    %764 = vmatpush1.msra.mxu0 0.0
    %765 = vmatprep.subr.mxu0 0.0
    %766 = vmatpush1.msra.mxu0 0.0
    %767 = vmatprep.subr.mxu0 0.0
    %768 = vmatpush1.msra.mxu0 0.0
    %769 = vmatprep.subr.mxu0 0.0
    %770 = vmatpush1.msra.mxu0 0.0
    %771 = vmatprep.subr.mxu0 0.0
    %772 = vmatpush1.msra.mxu0 0.0
    %773 = vmatprep.subr.mxu0 0.0
    %774 = vmatpush1.msra.mxu0 0.0
    %775 = vmatprep.subr.mxu0 0.0
    %776 = vmatpush1.msra.mxu0 0.0
    %777 = vmatprep.subr.mxu0 0.0
    %778 = vmatpush1.msra.mxu0 0.0
    %779 = vmatprep.mubr.f32.mxu0 0.0
    %780 = vmatmul.mubr.f32.gmra.mrb[0].mxu0 %v704
    %v781 = vpop.f32.mrb[0].mxu0
    %v782 = vadd.f32 0.0, %v781
    %v783 = vpop.f32.mrb[0].mxu0
    %784 = vmatprep.mubr.f32.mxu0 0.0
    %785 = vmatmul.mubr.f32.gmra.mrb[0].mxu0 %v707
    %v786 = vpop.f32.mrb[0].mxu0
    %v787 = vadd.f32 0.0, %v786
    %v788 = vpop.f32.mrb[0].mxu0
    %789 = vmatprep.mubr.f32.mxu0 0.0
    %790 = vmatmul.mubr.f32.gmra.mrb[0].mxu0 %v710
    %v791 = vpop.f32.mrb[0].mxu0
    %v792 = vadd.f32 0.0, %v791
    %v793 = vpop.f32.mrb[0].mxu0
    %794 = vmatprep.mubr.f32.mxu0 0.0
    %795 = vmatmul.mubr.f32.gmra.mrb[0].mxu0 %v713
    %v796 = vpop.f32.mrb[0].mxu0
    %v797 = vadd.f32 0.0, %v796
    %v798 = vpop.f32.mrb[0].mxu0
    %799 = vdwg.mxu0
    %v800 = vadd.f32 %v690, %v782
    %v801 = vadd.f32 %v691, %v787
    %v802 = vadd.f32 %v692, %v792
    %v803 = vadd.f32 %v693, %v797
    %v804 = vld [vmem:[#allocation3] sm:$0x1]
    %v806 = vlaneseq
    %v807 = vshrl.u32 %v806, 7
    %v808 = vsub.s32 0, %v807
    %v809 = vrot.slane %v804, %v808
    %v811 = vadd.f32 %v800, %v809
    %v812 = vadd.f32 %v801, %v809
    %v813 = vadd.f32 %v802, %v809
    %v814 = vadd.f32 %v803, %v809
    %v815 = vmax.f32 %v811, 0.0
    %v816 = vmax.f32 %v812, 0.0
    %v817 = vmax.f32 %v813, 0.0
    %v818 = vmax.f32 %v814, 0.0
    %819 = vst.msk [vmem:[#allocation2 + $0x8] sm:$0xff] %vm252, %v815
    %820 = vst.msk [vmem:[#allocation2 + $0x10] sm:$0xff] %vm252, %v816
    %821 = vst.msk [vmem:[#allocation2 + $0x20] sm:$0xff] %vm252, %v817
    %822 = vst.msk [vmem:[#allocation2 + $0x28] sm:$0xff] %vm252, %v818
    %v823 = vld [vmem:[#allocation2 + $0x4] sm:$0xff]
    %v824 = vld [vmem:[#allocation2 + $0xc] sm:$0xff]
    %v825 = vld [vmem:[#allocation2 + $0x1c] sm:$0xff]
    %v826 = vld [vmem:[#allocation2 + $0x24] sm:$0xff]
    %v827 = vld [vmem:[#allocation6] sm:$0xff]
    %v828 = vld [vmem:[#allocation6 + $0x8] sm:$0xff]
    %v829 = vld [vmem:[#allocation6 + $0x10] sm:$0xff]
    %v830 = vld [vmem:[#allocation6 + $0x18] sm:$0xff]
    %v831 = vld [vmem:[#allocation2 + $0x5] sm:$0xff]
    %v832 = vld [vmem:[#allocation2 + $0xd] sm:$0xff]
    %v833 = vld [vmem:[#allocation2 + $0x1d] sm:$0xff]
    %v834 = vld [vmem:[#allocation2 + $0x25] sm:$0xff]
    %s835 = scalar_lea.vmem [#allocation6], 32
    %v836 = vld [vmem:[%s835] sm:$0xff]
    %v837 = vld [vmem:[%s835 + $0x8] sm:$0xff]
    %v838 = vld [vmem:[%s835 + $0x10] sm:$0xff]
    %v839 = vld [vmem:[%s835 + $0x18] sm:$0xff]
    %v841 = vsel %vm252, %v831, 0
    %v844 = vsel %vm252, %v832, 0
    %v847 = vsel %vm252, %v833, 0
    %v850 = vsel %vm252, %v834, 0
    %852 = vmatprep.subr.mxu0 0.0
    %853 = vmatpush1.msra.mxu0 %v836
    %854 = vmatprep.subr.mxu0 0.0
    %855 = vmatpush1.msra.mxu0 %v837
    %856 = vmatprep.subr.mxu0 0.0
    %857 = vmatpush1.msra.mxu0 %v838
    %858 = vmatprep.subr.mxu0 0.0
    %859 = vmatpush1.msra.mxu0 %v839
    %860 = vmatprep.subr.mxu0 0.0
    %861 = vmatpush1.msra.mxu0 0.0
    %862 = vmatprep.subr.mxu0 0.0
    %863 = vmatpush1.msra.mxu0 0.0
    %864 = vmatprep.subr.mxu0 0.0
    %865 = vmatpush1.msra.mxu0 0.0
    %866 = vmatprep.subr.mxu0 0.0
    %867 = vmatpush1.msra.mxu0 0.0
    %868 = vmatprep.subr.mxu0 0.0
    %869 = vmatpush1.msra.mxu0 0.0
    %870 = vmatprep.subr.mxu0 0.0
    %871 = vmatpush1.msra.mxu0 0.0
    %872 = vmatprep.subr.mxu0 0.0
    %873 = vmatpush1.msra.mxu0 0.0
    %874 = vmatprep.subr.mxu0 0.0
    %875 = vmatpush1.msra.mxu0 0.0
    %876 = vmatprep.subr.mxu0 0.0
    %877 = vmatpush1.msra.mxu0 0.0
    %878 = vmatprep.subr.mxu0 0.0
    %879 = vmatpush1.msra.mxu0 0.0
    %880 = vmatprep.subr.mxu0 0.0
    %881 = vmatpush1.msra.mxu0 0.0
    %882 = vmatprep.subr.mxu0 0.0
    %883 = vmatpush1.msra.mxu0 0.0
    %884 = vmatprep.subr.mxu0 0.0
    %885 = vmatpush1.msra.mxu0 0.0
    %886 = vmatprep.subr.mxu0 0.0
    %887 = vmatpush1.msra.mxu0 0.0
    %888 = vmatprep.subr.mxu0 0.0
    %889 = vmatpush1.msra.mxu0 0.0
    %890 = vmatprep.subr.mxu0 0.0
    %891 = vmatpush1.msra.mxu0 0.0
    %892 = vmatprep.subr.mxu0 0.0
    %893 = vmatpush1.msra.mxu0 0.0
    %894 = vmatprep.subr.mxu0 0.0
    %895 = vmatpush1.msra.mxu0 0.0
    %896 = vmatprep.subr.mxu0 0.0
    %897 = vmatpush1.msra.mxu0 0.0
    %898 = vmatprep.subr.mxu0 0.0
    %899 = vmatpush1.msra.mxu0 0.0
    %900 = vmatprep.subr.mxu0 0.0
    %901 = vmatpush1.msra.mxu0 0.0
    %902 = vmatprep.subr.mxu0 0.0
    %903 = vmatpush1.msra.mxu0 0.0
    %904 = vmatprep.subr.mxu0 0.0
    %905 = vmatpush1.msra.mxu0 0.0
    %906 = vmatprep.subr.mxu0 0.0
    %907 = vmatpush1.msra.mxu0 0.0
    %908 = vmatprep.subr.mxu0 0.0
    %909 = vmatpush1.msra.mxu0 0.0
    %910 = vmatprep.subr.mxu0 0.0
    %911 = vmatpush1.msra.mxu0 0.0
    %912 = vmatprep.subr.mxu0 0.0
    %913 = vmatpush1.msra.mxu0 0.0
    %914 = vmatprep.subr.mxu0 0.0
    %915 = vmatpush1.msra.mxu0 0.0
    %916 = vmatprep.mubr.f32.mxu0 0.0
    %917 = vmatmul.mubr.f32.gmra.mrb[0].mxu0 %v841
    %v918 = vpop.f32.mrb[0].mxu0
    %v919 = vadd.f32 0.0, %v918
    %v920 = vpop.f32.mrb[0].mxu0
    %921 = vmatprep.mubr.f32.mxu0 0.0
    %922 = vmatmul.mubr.f32.gmra.mrb[0].mxu0 %v844
    %v923 = vpop.f32.mrb[0].mxu0
    %v924 = vadd.f32 0.0, %v923
    %v925 = vpop.f32.mrb[0].mxu0
    %926 = vmatprep.mubr.f32.mxu0 0.0
    %927 = vmatmul.mubr.f32.gmra.mrb[0].mxu0 %v847
    %v928 = vpop.f32.mrb[0].mxu0
    %v929 = vadd.f32 0.0, %v928
    %v930 = vpop.f32.mrb[0].mxu0
    %931 = vmatprep.mubr.f32.mxu0 0.0
    %932 = vmatmul.mubr.f32.gmra.mrb[0].mxu0 %v850
    %v933 = vpop.f32.mrb[0].mxu0
    %v934 = vadd.f32 0.0, %v933
    %v935 = vpop.f32.mrb[0].mxu0
    %936 = vdwg.mxu0
    %v938 = vsel %vm252, %v823, 0
    %v941 = vsel %vm252, %v824, 0
    %v944 = vsel %vm252, %v825, 0
    %v947 = vsel %vm252, %v826, 0
    %949 = vmatprep.subr.mxu0 0.0
    %950 = vmatpush1.msra.mxu0 %v827
    %951 = vmatprep.subr.mxu0 0.0
    %952 = vmatpush1.msra.mxu0 %v828
    %953 = vmatprep.subr.mxu0 0.0
    %954 = vmatpush1.msra.mxu0 %v829
    %955 = vmatprep.subr.mxu0 0.0
    %956 = vmatpush1.msra.mxu0 %v830
    %957 = vmatprep.subr.mxu0 0.0
    %958 = vmatpush1.msra.mxu0 0.0
    %959 = vmatprep.subr.mxu0 0.0
    %960 = vmatpush1.msra.mxu0 0.0
    %961 = vmatprep.subr.mxu0 0.0
    %962 = vmatpush1.msra.mxu0 0.0
    %963 = vmatprep.subr.mxu0 0.0
    %964 = vmatpush1.msra.mxu0 0.0
    %965 = vmatprep.subr.mxu0 0.0
    %966 = vmatpush1.msra.mxu0 0.0
    %967 = vmatprep.subr.mxu0 0.0
    %968 = vmatpush1.msra.mxu0 0.0
    %969 = vmatprep.subr.mxu0 0.0
    %970 = vmatpush1.msra.mxu0 0.0
    %971 = vmatprep.subr.mxu0 0.0
    %972 = vmatpush1.msra.mxu0 0.0
    %973 = vmatprep.subr.mxu0 0.0
    %974 = vmatpush1.msra.mxu0 0.0
    %975 = vmatprep.subr.mxu0 0.0
    %976 = vmatpush1.msra.mxu0 0.0
    %977 = vmatprep.subr.mxu0 0.0
    %978 = vmatpush1.msra.mxu0 0.0
    %979 = vmatprep.subr.mxu0 0.0
    %980 = vmatpush1.msra.mxu0 0.0
    %981 = vmatprep.subr.mxu0 0.0
    %982 = vmatpush1.msra.mxu0 0.0
    %983 = vmatprep.subr.mxu0 0.0
    %984 = vmatpush1.msra.mxu0 0.0
    %985 = vmatprep.subr.mxu0 0.0
    %986 = vmatpush1.msra.mxu0 0.0
    %987 = vmatprep.subr.mxu0 0.0
    %988 = vmatpush1.msra.mxu0 0.0
    %989 = vmatprep.subr.mxu0 0.0
    %990 = vmatpush1.msra.mxu0 0.0
    %991 = vmatprep.subr.mxu0 0.0
    %992 = vmatpush1.msra.mxu0 0.0
    %993 = vmatprep.subr.mxu0 0.0
    %994 = vmatpush1.msra.mxu0 0.0
    %995 = vmatprep.subr.mxu0 0.0
    %996 = vmatpush1.msra.mxu0 0.0
    %997 = vmatprep.subr.mxu0 0.0
    %998 = vmatpush1.msra.mxu0 0.0
    %999 = vmatprep.subr.mxu0 0.0
    %1000 = vmatpush1.msra.mxu0 0.0
    %1001 = vmatprep.subr.mxu0 0.0
    %1002 = vmatpush1.msra.mxu0 0.0
    %1003 = vmatprep.subr.mxu0 0.0
    %1004 = vmatpush1.msra.mxu0 0.0
    %1005 = vmatprep.subr.mxu0 0.0
    %1006 = vmatpush1.msra.mxu0 0.0
    %1007 = vmatprep.subr.mxu0 0.0
    %1008 = vmatpush1.msra.mxu0 0.0
    %1009 = vmatprep.subr.mxu0 0.0
    %1010 = vmatpush1.msra.mxu0 0.0
    %1011 = vmatprep.subr.mxu0 0.0
    %1012 = vmatpush1.msra.mxu0 0.0
    %1013 = vmatprep.mubr.f32.mxu0 0.0
    %1014 = vmatmul.mubr.f32.gmra.mrb[0].mxu0 %v938
    %v1015 = vpop.f32.mrb[0].mxu0
    %v1016 = vadd.f32 %v919, %v1015
    %v1017 = vpop.f32.mrb[0].mxu0
    %1018 = vmatprep.mubr.f32.mxu0 0.0
    %1019 = vmatmul.mubr.f32.gmra.mrb[0].mxu0 %v941
    %v1020 = vpop.f32.mrb[0].mxu0
    %v1021 = vadd.f32 %v924, %v1020
    %v1022 = vpop.f32.mrb[0].mxu0
    %1023 = vmatprep.mubr.f32.mxu0 0.0
    %1024 = vmatmul.mubr.f32.gmra.mrb[0].mxu0 %v944
    %v1025 = vpop.f32.mrb[0].mxu0
    %v1026 = vadd.f32 %v929, %v1025
    %v1027 = vpop.f32.mrb[0].mxu0
    %1028 = vmatprep.mubr.f32.mxu0 0.0
    %1029 = vmatmul.mubr.f32.gmra.mrb[0].mxu0 %v947
    %v1030 = vpop.f32.mrb[0].mxu0
    %v1031 = vadd.f32 %v934, %v1030
    %v1032 = vpop.f32.mrb[0].mxu0
    %1033 = vdwg.mxu0
    %v1034 = vld [vmem:[#allocation2 + $0x6] sm:$0xff]
    %v1035 = vld [vmem:[#allocation2 + $0xe] sm:$0xff]
    %v1036 = vld [vmem:[#allocation2 + $0x1e] sm:$0xff]
    %v1037 = vld [vmem:[#allocation2 + $0x26] sm:$0xff]
    %s1038 = scalar_lea.vmem [#allocation6], 64
    %v1039 = vld [vmem:[%s1038] sm:$0xff]
    %v1040 = vld [vmem:[%s1038 + $0x8] sm:$0xff]
    %v1041 = vld [vmem:[%s1038 + $0x10] sm:$0xff]
    %v1042 = vld [vmem:[%s1038 + $0x18] sm:$0xff]
    %v1044 = vsel %vm252, %v1034, 0
    %v1047 = vsel %vm252, %v1035, 0
    %v1050 = vsel %vm252, %v1036, 0
    %v1053 = vsel %vm252, %v1037, 0
    %1055 = vmatprep.subr.mxu0 0.0
    %1056 = vmatpush1.msra.mxu0 %v1039
    %1057 = vmatprep.subr.mxu0 0.0
    %1058 = vmatpush1.msra.mxu0 %v1040
    %1059 = vmatprep.subr.mxu0 0.0
    %1060 = vmatpush1.msra.mxu0 %v1041
    %1061 = vmatprep.subr.mxu0 0.0
    %1062 = vmatpush1.msra.mxu0 %v1042
    %1063 = vmatprep.subr.mxu0 0.0
    %1064 = vmatpush1.msra.mxu0 0.0
    %1065 = vmatprep.subr.mxu0 0.0
    %1066 = vmatpush1.msra.mxu0 0.0
    %1067 = vmatprep.subr.mxu0 0.0
    %1068 = vmatpush1.msra.mxu0 0.0
    %1069 = vmatprep.subr.mxu0 0.0
    %1070 = vmatpush1.msra.mxu0 0.0
    %1071 = vmatprep.subr.mxu0 0.0
    %1072 = vmatpush1.msra.mxu0 0.0
    %1073 = vmatprep.subr.mxu0 0.0
    %1074 = vmatpush1.msra.mxu0 0.0
    %1075 = vmatprep.subr.mxu0 0.0
    %1076 = vmatpush1.msra.mxu0 0.0
    %1077 = vmatprep.subr.mxu0 0.0
    %1078 = vmatpush1.msra.mxu0 0.0
    %1079 = vmatprep.subr.mxu0 0.0
    %1080 = vmatpush1.msra.mxu0 0.0
    %1081 = vmatprep.subr.mxu0 0.0
    %1082 = vmatpush1.msra.mxu0 0.0
    %1083 = vmatprep.subr.mxu0 0.0
    %1084 = vmatpush1.msra.mxu0 0.0
    %1085 = vmatprep.subr.mxu0 0.0
    %1086 = vmatpush1.msra.mxu0 0.0
    %1087 = vmatprep.subr.mxu0 0.0
    %1088 = vmatpush1.msra.mxu0 0.0
    %1089 = vmatprep.subr.mxu0 0.0
    %1090 = vmatpush1.msra.mxu0 0.0
    %1091 = vmatprep.subr.mxu0 0.0
    %1092 = vmatpush1.msra.mxu0 0.0
    %1093 = vmatprep.subr.mxu0 0.0
    %1094 = vmatpush1.msra.mxu0 0.0
    %1095 = vmatprep.subr.mxu0 0.0
    %1096 = vmatpush1.msra.mxu0 0.0
    %1097 = vmatprep.subr.mxu0 0.0
    %1098 = vmatpush1.msra.mxu0 0.0
    %1099 = vmatprep.subr.mxu0 0.0
    %1100 = vmatpush1.msra.mxu0 0.0
    %1101 = vmatprep.subr.mxu0 0.0
    %1102 = vmatpush1.msra.mxu0 0.0
    %1103 = vmatprep.subr.mxu0 0.0
    %1104 = vmatpush1.msra.mxu0 0.0
    %1105 = vmatprep.subr.mxu0 0.0
    %1106 = vmatpush1.msra.mxu0 0.0
    %1107 = vmatprep.subr.mxu0 0.0
    %1108 = vmatpush1.msra.mxu0 0.0
    %1109 = vmatprep.subr.mxu0 0.0
    %1110 = vmatpush1.msra.mxu0 0.0
    %1111 = vmatprep.subr.mxu0 0.0
    %1112 = vmatpush1.msra.mxu0 0.0
    %1113 = vmatprep.subr.mxu0 0.0
    %1114 = vmatpush1.msra.mxu0 0.0
    %1115 = vmatprep.subr.mxu0 0.0
    %1116 = vmatpush1.msra.mxu0 0.0
    %1117 = vmatprep.subr.mxu0 0.0
    %1118 = vmatpush1.msra.mxu0 0.0
    %1119 = vmatprep.mubr.f32.mxu0 0.0
    %1120 = vmatmul.mubr.f32.gmra.mrb[0].mxu0 %v1044
    %v1121 = vpop.f32.mrb[0].mxu0
    %v1122 = vadd.f32 0.0, %v1121
    %v1123 = vpop.f32.mrb[0].mxu0
    %1124 = vmatprep.mubr.f32.mxu0 0.0
    %1125 = vmatmul.mubr.f32.gmra.mrb[0].mxu0 %v1047
    %v1126 = vpop.f32.mrb[0].mxu0
    %v1127 = vadd.f32 0.0, %v1126
    %v1128 = vpop.f32.mrb[0].mxu0
    %1129 = vmatprep.mubr.f32.mxu0 0.0
    %1130 = vmatmul.mubr.f32.gmra.mrb[0].mxu0 %v1050
    %v1131 = vpop.f32.mrb[0].mxu0
    %v1132 = vadd.f32 0.0, %v1131
    %v1133 = vpop.f32.mrb[0].mxu0
    %1134 = vmatprep.mubr.f32.mxu0 0.0
    %1135 = vmatmul.mubr.f32.gmra.mrb[0].mxu0 %v1053
    %v1136 = vpop.f32.mrb[0].mxu0
    %v1137 = vadd.f32 0.0, %v1136
    %v1138 = vpop.f32.mrb[0].mxu0
    %1139 = vdwg.mxu0
    %v1140 = vadd.f32 %v1016, %v1122
    %v1141 = vadd.f32 %v1021, %v1127
    %v1142 = vadd.f32 %v1026, %v1132
    %v1143 = vadd.f32 %v1031, %v1137
    %v1144 = vld [vmem:[#allocation2 + $0x7] sm:$0xff]
    %v1145 = vld [vmem:[#allocation2 + $0xf] sm:$0xff]
    %v1146 = vld [vmem:[#allocation2 + $0x1f] sm:$0xff]
    %v1147 = vld [vmem:[#allocation2 + $0x27] sm:$0xff]
    %s1148 = scalar_lea.vmem [#allocation6], 96
    %v1149 = vld [vmem:[%s1148] sm:$0xff]
    %v1150 = vld [vmem:[%s1148 + $0x8] sm:$0xff]
    %v1151 = vld [vmem:[%s1148 + $0x10] sm:$0xff]
    %v1152 = vld [vmem:[%s1148 + $0x18] sm:$0xff]
    %v1154 = vsel %vm252, %v1144, 0
    %v1157 = vsel %vm252, %v1145, 0
    %v1160 = vsel %vm252, %v1146, 0
    %v1163 = vsel %vm252, %v1147, 0
    %1165 = vmatprep.subr.mxu0 0.0
    %1166 = vmatpush1.msra.mxu0 %v1149
    %1167 = vmatprep.subr.mxu0 0.0
    %1168 = vmatpush1.msra.mxu0 %v1150
    %1169 = vmatprep.subr.mxu0 0.0
    %1170 = vmatpush1.msra.mxu0 %v1151
    %1171 = vmatprep.subr.mxu0 0.0
    %1172 = vmatpush1.msra.mxu0 %v1152
    %1173 = vmatprep.subr.mxu0 0.0
    %1174 = vmatpush1.msra.mxu0 0.0
    %1175 = vmatprep.subr.mxu0 0.0
    %1176 = vmatpush1.msra.mxu0 0.0
    %1177 = vmatprep.subr.mxu0 0.0
    %1178 = vmatpush1.msra.mxu0 0.0
    %1179 = vmatprep.subr.mxu0 0.0
    %1180 = vmatpush1.msra.mxu0 0.0
    %1181 = vmatprep.subr.mxu0 0.0
    %1182 = vmatpush1.msra.mxu0 0.0
    %1183 = vmatprep.subr.mxu0 0.0
    %1184 = vmatpush1.msra.mxu0 0.0
    %1185 = vmatprep.subr.mxu0 0.0
    %1186 = vmatpush1.msra.mxu0 0.0
    %1187 = vmatprep.subr.mxu0 0.0
    %1188 = vmatpush1.msra.mxu0 0.0
    %1189 = vmatprep.subr.mxu0 0.0
    %1190 = vmatpush1.msra.mxu0 0.0
    %1191 = vmatprep.subr.mxu0 0.0
    %1192 = vmatpush1.msra.mxu0 0.0
    %1193 = vmatprep.subr.mxu0 0.0
    %1194 = vmatpush1.msra.mxu0 0.0
    %1195 = vmatprep.subr.mxu0 0.0
    %1196 = vmatpush1.msra.mxu0 0.0
    %1197 = vmatprep.subr.mxu0 0.0
    %1198 = vmatpush1.msra.mxu0 0.0
    %1199 = vmatprep.subr.mxu0 0.0
    %1200 = vmatpush1.msra.mxu0 0.0
    %1201 = vmatprep.subr.mxu0 0.0
    %1202 = vmatpush1.msra.mxu0 0.0
    %1203 = vmatprep.subr.mxu0 0.0
    %1204 = vmatpush1.msra.mxu0 0.0
    %1205 = vmatprep.subr.mxu0 0.0
    %1206 = vmatpush1.msra.mxu0 0.0
    %1207 = vmatprep.subr.mxu0 0.0
    %1208 = vmatpush1.msra.mxu0 0.0
    %1209 = vmatprep.subr.mxu0 0.0
    %1210 = vmatpush1.msra.mxu0 0.0
    %1211 = vmatprep.subr.mxu0 0.0
    %1212 = vmatpush1.msra.mxu0 0.0
    %1213 = vmatprep.subr.mxu0 0.0
    %1214 = vmatpush1.msra.mxu0 0.0
    %1215 = vmatprep.subr.mxu0 0.0
    %1216 = vmatpush1.msra.mxu0 0.0
    %1217 = vmatprep.subr.mxu0 0.0
    %1218 = vmatpush1.msra.mxu0 0.0
    %1219 = vmatprep.subr.mxu0 0.0
    %1220 = vmatpush1.msra.mxu0 0.0
    %1221 = vmatprep.subr.mxu0 0.0
    %1222 = vmatpush1.msra.mxu0 0.0
    %1223 = vmatprep.subr.mxu0 0.0
    %1224 = vmatpush1.msra.mxu0 0.0
    %1225 = vmatprep.subr.mxu0 0.0
    %1226 = vmatpush1.msra.mxu0 0.0
    %1227 = vmatprep.subr.mxu0 0.0
    %1228 = vmatpush1.msra.mxu0 0.0
    %1229 = vmatprep.mubr.f32.mxu0 0.0
    %1230 = vmatmul.mubr.f32.gmra.mrb[0].mxu0 %v1154
    %v1231 = vpop.f32.mrb[0].mxu0
    %v1232 = vadd.f32 0.0, %v1231
    %v1233 = vpop.f32.mrb[0].mxu0
    %1234 = vmatprep.mubr.f32.mxu0 0.0
    %1235 = vmatmul.mubr.f32.gmra.mrb[0].mxu0 %v1157
    %v1236 = vpop.f32.mrb[0].mxu0
    %v1237 = vadd.f32 0.0, %v1236
    %v1238 = vpop.f32.mrb[0].mxu0
    %1239 = vmatprep.mubr.f32.mxu0 0.0
    %1240 = vmatmul.mubr.f32.gmra.mrb[0].mxu0 %v1160
    %v1241 = vpop.f32.mrb[0].mxu0
    %v1242 = vadd.f32 0.0, %v1241
    %v1243 = vpop.f32.mrb[0].mxu0
    %1244 = vmatprep.mubr.f32.mxu0 0.0
    %1245 = vmatmul.mubr.f32.gmra.mrb[0].mxu0 %v1163
    %v1246 = vpop.f32.mrb[0].mxu0
    %v1247 = vadd.f32 0.0, %v1246
    %v1248 = vpop.f32.mrb[0].mxu0
    %1249 = vdwg.mxu0
    %v1250 = vadd.f32 %v1140, %v1232
    %v1251 = vadd.f32 %v1141, %v1237
    %v1252 = vadd.f32 %v1142, %v1242
    %v1253 = vadd.f32 %v1143, %v1247
    %v1254 = vld [vmem:[#allocation2 + $0x8] sm:$0xff]
    %v1255 = vld [vmem:[#allocation2 + $0x10] sm:$0xff]
    %v1256 = vld [vmem:[#allocation2 + $0x20] sm:$0xff]
    %v1257 = vld [vmem:[#allocation2 + $0x28] sm:$0xff]
    %s1258 = scalar_lea.vmem [#allocation6], 128
    %v1259 = vld [vmem:[%s1258] sm:$0xff]
    %v1260 = vld [vmem:[%s1258 + $0x8] sm:$0xff]
    %v1261 = vld [vmem:[%s1258 + $0x10] sm:$0xff]
    %v1262 = vld [vmem:[%s1258 + $0x18] sm:$0xff]
    %v1264 = vsel %vm252, %v1254, 0
    %v1267 = vsel %vm252, %v1255, 0
    %v1270 = vsel %vm252, %v1256, 0
    %v1273 = vsel %vm252, %v1257, 0
    %1275 = vmatprep.subr.mxu0 0.0
    %1276 = vmatpush1.msra.mxu0 %v1259
    %1277 = vmatprep.subr.mxu0 0.0
    %1278 = vmatpush1.msra.mxu0 %v1260
    %1279 = vmatprep.subr.mxu0 0.0
    %1280 = vmatpush1.msra.mxu0 %v1261
    %1281 = vmatprep.subr.mxu0 0.0
    %1282 = vmatpush1.msra.mxu0 %v1262
    %1283 = vmatprep.subr.mxu0 0.0
    %1284 = vmatpush1.msra.mxu0 0.0
    %1285 = vmatprep.subr.mxu0 0.0
    %1286 = vmatpush1.msra.mxu0 0.0
    %1287 = vmatprep.subr.mxu0 0.0
    %1288 = vmatpush1.msra.mxu0 0.0
    %1289 = vmatprep.subr.mxu0 0.0
    %1290 = vmatpush1.msra.mxu0 0.0
    %1291 = vmatprep.subr.mxu0 0.0
    %1292 = vmatpush1.msra.mxu0 0.0
    %1293 = vmatprep.subr.mxu0 0.0
    %1294 = vmatpush1.msra.mxu0 0.0
    %1295 = vmatprep.subr.mxu0 0.0
    %1296 = vmatpush1.msra.mxu0 0.0
    %1297 = vmatprep.subr.mxu0 0.0
    %1298 = vmatpush1.msra.mxu0 0.0
    %1299 = vmatprep.subr.mxu0 0.0
    %1300 = vmatpush1.msra.mxu0 0.0
    %1301 = vmatprep.subr.mxu0 0.0
    %1302 = vmatpush1.msra.mxu0 0.0
    %1303 = vmatprep.subr.mxu0 0.0
    %1304 = vmatpush1.msra.mxu0 0.0
    %1305 = vmatprep.subr.mxu0 0.0
    %1306 = vmatpush1.msra.mxu0 0.0
    %1307 = vmatprep.subr.mxu0 0.0
    %1308 = vmatpush1.msra.mxu0 0.0
    %1309 = vmatprep.subr.mxu0 0.0
    %1310 = vmatpush1.msra.mxu0 0.0
    %1311 = vmatprep.subr.mxu0 0.0
    %1312 = vmatpush1.msra.mxu0 0.0
    %1313 = vmatprep.subr.mxu0 0.0
    %1314 = vmatpush1.msra.mxu0 0.0
    %1315 = vmatprep.subr.mxu0 0.0
    %1316 = vmatpush1.msra.mxu0 0.0
    %1317 = vmatprep.subr.mxu0 0.0
    %1318 = vmatpush1.msra.mxu0 0.0
    %1319 = vmatprep.subr.mxu0 0.0
    %1320 = vmatpush1.msra.mxu0 0.0
    %1321 = vmatprep.subr.mxu0 0.0
    %1322 = vmatpush1.msra.mxu0 0.0
    %1323 = vmatprep.subr.mxu0 0.0
    %1324 = vmatpush1.msra.mxu0 0.0
    %1325 = vmatprep.subr.mxu0 0.0
    %1326 = vmatpush1.msra.mxu0 0.0
    %1327 = vmatprep.subr.mxu0 0.0
    %1328 = vmatpush1.msra.mxu0 0.0
    %1329 = vmatprep.subr.mxu0 0.0
    %1330 = vmatpush1.msra.mxu0 0.0
    %1331 = vmatprep.subr.mxu0 0.0
    %1332 = vmatpush1.msra.mxu0 0.0
    %1333 = vmatprep.subr.mxu0 0.0
    %1334 = vmatpush1.msra.mxu0 0.0
    %1335 = vmatprep.subr.mxu0 0.0
    %1336 = vmatpush1.msra.mxu0 0.0
    %1337 = vmatprep.subr.mxu0 0.0
    %1338 = vmatpush1.msra.mxu0 0.0
    %1339 = vmatprep.mubr.f32.mxu0 0.0
    %1340 = vmatmul.mubr.f32.gmra.mrb[0].mxu0 %v1264
    %v1341 = vpop.f32.mrb[0].mxu0
    %v1342 = vadd.f32 0.0, %v1341
    %v1343 = vpop.f32.mrb[0].mxu0
    %1344 = vmatprep.mubr.f32.mxu0 0.0
    %1345 = vmatmul.mubr.f32.gmra.mrb[0].mxu0 %v1267
    %v1346 = vpop.f32.mrb[0].mxu0
    %v1347 = vadd.f32 0.0, %v1346
    %v1348 = vpop.f32.mrb[0].mxu0
    %1349 = vmatprep.mubr.f32.mxu0 0.0
    %1350 = vmatmul.mubr.f32.gmra.mrb[0].mxu0 %v1270
    %v1351 = vpop.f32.mrb[0].mxu0
    %v1352 = vadd.f32 0.0, %v1351
    %v1353 = vpop.f32.mrb[0].mxu0
    %1354 = vmatprep.mubr.f32.mxu0 0.0
    %1355 = vmatmul.mubr.f32.gmra.mrb[0].mxu0 %v1273
    %v1356 = vpop.f32.mrb[0].mxu0
    %v1357 = vadd.f32 0.0, %v1356
    %v1358 = vpop.f32.mrb[0].mxu0
    %1359 = vdwg.mxu0
    %v1360 = vadd.f32 %v1250, %v1342
    %v1361 = vadd.f32 %v1251, %v1347
    %v1362 = vadd.f32 %v1252, %v1352
    %v1363 = vadd.f32 %v1253, %v1357
    %v1364 = vld [vmem:[#allocation8] sm:$0x1]
    %v1366 = vlaneseq
    %v1367 = vshrl.u32 %v1366, 7
    %v1368 = vsub.s32 0, %v1367
    %v1369 = vrot.slane %v1364, %v1368
    %v1371 = vadd.f32 %v1360, %v1369
    %v1372 = vadd.f32 %v1361, %v1369
    %v1373 = vadd.f32 %v1362, %v1369
    %v1374 = vadd.f32 %v1363, %v1369
    %v1375 = vmax.f32 %v1371, 0.0
    %v1376 = vmax.f32 %v1372, 0.0
    %v1377 = vmax.f32 %v1373, 0.0
    %v1378 = vmax.f32 %v1374, 0.0
    %v1379 = vsel %vm252, %v1375, -inf
    %v1380 = vsel %vm252, %v1376, -inf
    %v1381 = vmax.f32 %v1379, %v1380
    %v1382 = vrot.slane %v1381, 4
    %v1383 = vmax.f32 %v1381, %v1382
    %v1384 = vrot.slane %v1383, 2
    %v1385 = vmax.f32 %v1383, %v1384
    %v1386 = vrot.slane %v1385, 1
    %v1387 = vmax.f32 %v1385, %v1386
    %v1388 = vsel %vm252, %v1377, -inf
    %v1389 = vsel %vm252, %v1378, -inf
    %v1390 = vmax.f32 %v1388, %v1389
    %v1391 = vrot.slane %v1390, 4
    %v1392 = vmax.f32 %v1390, %v1391
    %v1393 = vrot.slane %v1392, 2
    %v1394 = vmax.f32 %v1392, %v1393
    %v1395 = vrot.slane %v1394, 1
    %v1396 = vmax.f32 %v1394, %v1395
    %v1397 = vld [vmem:[%s7] sm:$0xff]
    %v1398 = vld [vmem:[%s7 + $0x8] sm:$0xff]
    %v1399 = vld [vmem:[%s7 + $0x10] sm:$0xff]
    %v1400 = vld [vmem:[%s7 + $0x18] sm:$0xff]
    %v1401 = vld [vmem:[#allocation9] sm:$0x1]
    %v1403 = vlaneseq
    %v1404 = vshrl.u32 %v1403, 7
    %v1405 = vsub.s32 0, %v1404
    %v1406 = vrot.slane %v1401, %v1405
    %vm1410 = vcmask 1041409
    %v1411 = vsel %vm1410, %v1396, %v1387
    %v1412 = vsel %vm252, %v1411, 0
    %1414 = vmatprep.subr.mxu0 0.0
    %1415 = vmatpush1.msra.mxu0 %v1397
    %1416 = vmatprep.subr.mxu0 0.0
    %1417 = vmatpush1.msra.mxu0 %v1398
    %1418 = vmatprep.subr.mxu0 0.0
    %1419 = vmatpush1.msra.mxu0 %v1399
    %1420 = vmatprep.subr.mxu0 0.0
    %1421 = vmatpush1.msra.mxu0 %v1400
    %1422 = vmatprep.subr.mxu0 0.0
    %1423 = vmatpush1.msra.mxu0 0.0
    %1424 = vmatprep.subr.mxu0 0.0
    %1425 = vmatpush1.msra.mxu0 0.0
    %1426 = vmatprep.subr.mxu0 0.0
    %1427 = vmatpush1.msra.mxu0 0.0
    %1428 = vmatprep.subr.mxu0 0.0
    %1429 = vmatpush1.msra.mxu0 0.0
    %1430 = vmatprep.subr.mxu0 0.0
    %1431 = vmatpush1.msra.mxu0 0.0
    %1432 = vmatprep.subr.mxu0 0.0
    %1433 = vmatpush1.msra.mxu0 0.0
    %1434 = vmatprep.subr.mxu0 0.0
    %1435 = vmatpush1.msra.mxu0 0.0
    %1436 = vmatprep.subr.mxu0 0.0
    %1437 = vmatpush1.msra.mxu0 0.0
    %1438 = vmatprep.subr.mxu0 0.0
    %1439 = vmatpush1.msra.mxu0 0.0
    %1440 = vmatprep.subr.mxu0 0.0
    %1441 = vmatpush1.msra.mxu0 0.0
    %1442 = vmatprep.subr.mxu0 0.0
    %1443 = vmatpush1.msra.mxu0 0.0
    %1444 = vmatprep.subr.mxu0 0.0
    %1445 = vmatpush1.msra.mxu0 0.0
    %1446 = vmatprep.subr.mxu0 0.0
    %1447 = vmatpush1.msra.mxu0 0.0
    %1448 = vmatprep.subr.mxu0 0.0
    %1449 = vmatpush1.msra.mxu0 0.0
    %1450 = vmatprep.subr.mxu0 0.0
    %1451 = vmatpush1.msra.mxu0 0.0
    %1452 = vmatprep.subr.mxu0 0.0
    %1453 = vmatpush1.msra.mxu0 0.0
    %1454 = vmatprep.subr.mxu0 0.0
    %1455 = vmatpush1.msra.mxu0 0.0
    %1456 = vmatprep.subr.mxu0 0.0
    %1457 = vmatpush1.msra.mxu0 0.0
    %1458 = vmatprep.subr.mxu0 0.0
    %1459 = vmatpush1.msra.mxu0 0.0
    %1460 = vmatprep.subr.mxu0 0.0
    %1461 = vmatpush1.msra.mxu0 0.0
    %1462 = vmatprep.subr.mxu0 0.0
    %1463 = vmatpush1.msra.mxu0 0.0
    %1464 = vmatprep.subr.mxu0 0.0
    %1465 = vmatpush1.msra.mxu0 0.0
    %1466 = vmatprep.subr.mxu0 0.0
    %1467 = vmatpush1.msra.mxu0 0.0
    %1468 = vmatprep.subr.mxu0 0.0
    %1469 = vmatpush1.msra.mxu0 0.0
    %1470 = vmatprep.subr.mxu0 0.0
    %1471 = vmatpush1.msra.mxu0 0.0
    %1472 = vmatprep.subr.mxu0 0.0
    %1473 = vmatpush1.msra.mxu0 0.0
    %1474 = vmatprep.subr.mxu0 0.0
    %1475 = vmatpush1.msra.mxu0 0.0
    %1476 = vmatprep.subr.mxu0 0.0
    %1477 = vmatpush1.msra.mxu0 0.0
    %1478 = vmatprep.mubr.f32.mxu0 0.0
    %1479 = vmatmul.mubr.f32.gmra.mrb[0].mxu0 %v1412
    %v1480 = vpop.f32.mrb[0].mxu0
    %v1481 = vadd.f32 %v1406, %v1480
    %v1482 = vpop.f32.mrb[0].mxu0
    %1483 = vdwg.mxu0
    %v1484 = vmax.f32 %v1481, 0.0
    %v1485 = vld [vmem:[%s9] sm:$0xff]
    %v1486 = vld [vmem:[%s9 + $0x8] sm:$0xff]
    %v1487 = vld [vmem:[%s9 + $0x10] sm:$0xff]
    %v1488 = vld [vmem:[%s9 + $0x18] sm:$0xff]
    %v1489 = vld [vmem:[#allocation11] sm:$0x1]
    %v1491 = vlaneseq
    %v1492 = vshrl.u32 %v1491, 7
    %v1493 = vsub.s32 0, %v1492
    %v1494 = vrot.slane %v1489, %v1493
    %v1497 = vsel %vm252, %v1484, 0
    %1499 = vmatprep.subr.mxu0 0.0
    %1500 = vmatpush1.msra.mxu0 %v1485
    %1501 = vmatprep.subr.mxu0 0.0
    %1502 = vmatpush1.msra.mxu0 %v1486
    %1503 = vmatprep.subr.mxu0 0.0
    %1504 = vmatpush1.msra.mxu0 %v1487
    %1505 = vmatprep.subr.mxu0 0.0
    %1506 = vmatpush1.msra.mxu0 %v1488
    %1507 = vmatprep.subr.mxu0 0.0
    %1508 = vmatpush1.msra.mxu0 0.0
    %1509 = vmatprep.subr.mxu0 0.0
    %1510 = vmatpush1.msra.mxu0 0.0
    %1511 = vmatprep.subr.mxu0 0.0
    %1512 = vmatpush1.msra.mxu0 0.0
    %1513 = vmatprep.subr.mxu0 0.0
    %1514 = vmatpush1.msra.mxu0 0.0
    %1515 = vmatprep.subr.mxu0 0.0
    %1516 = vmatpush1.msra.mxu0 0.0
    %1517 = vmatprep.subr.mxu0 0.0
    %1518 = vmatpush1.msra.mxu0 0.0
    %1519 = vmatprep.subr.mxu0 0.0
    %1520 = vmatpush1.msra.mxu0 0.0
    %1521 = vmatprep.subr.mxu0 0.0
    %1522 = vmatpush1.msra.mxu0 0.0
    %1523 = vmatprep.subr.mxu0 0.0
    %1524 = vmatpush1.msra.mxu0 0.0
    %1525 = vmatprep.subr.mxu0 0.0
    %1526 = vmatpush1.msra.mxu0 0.0
    %1527 = vmatprep.subr.mxu0 0.0
    %1528 = vmatpush1.msra.mxu0 0.0
    %1529 = vmatprep.subr.mxu0 0.0
    %1530 = vmatpush1.msra.mxu0 0.0
    %1531 = vmatprep.subr.mxu0 0.0
    %1532 = vmatpush1.msra.mxu0 0.0
    %1533 = vmatprep.subr.mxu0 0.0
    %1534 = vmatpush1.msra.mxu0 0.0
    %1535 = vmatprep.subr.mxu0 0.0
    %1536 = vmatpush1.msra.mxu0 0.0
    %1537 = vmatprep.subr.mxu0 0.0
    %1538 = vmatpush1.msra.mxu0 0.0
    %1539 = vmatprep.subr.mxu0 0.0
    %1540 = vmatpush1.msra.mxu0 0.0
    %1541 = vmatprep.subr.mxu0 0.0
    %1542 = vmatpush1.msra.mxu0 0.0
    %1543 = vmatprep.subr.mxu0 0.0
    %1544 = vmatpush1.msra.mxu0 0.0
    %1545 = vmatprep.subr.mxu0 0.0
    %1546 = vmatpush1.msra.mxu0 0.0
    %1547 = vmatprep.subr.mxu0 0.0
    %1548 = vmatpush1.msra.mxu0 0.0
    %1549 = vmatprep.subr.mxu0 0.0
    %1550 = vmatpush1.msra.mxu0 0.0
    %1551 = vmatprep.subr.mxu0 0.0
    %1552 = vmatpush1.msra.mxu0 0.0
    %1553 = vmatprep.subr.mxu0 0.0
    %1554 = vmatpush1.msra.mxu0 0.0
    %1555 = vmatprep.subr.mxu0 0.0
    %1556 = vmatpush1.msra.mxu0 0.0
    %1557 = vmatprep.subr.mxu0 0.0
    %1558 = vmatpush1.msra.mxu0 0.0
    %1559 = vmatprep.subr.mxu0 0.0
    %1560 = vmatpush1.msra.mxu0 0.0
    %1561 = vmatprep.subr.mxu0 0.0
    %1562 = vmatpush1.msra.mxu0 0.0
    %1563 = vmatprep.mubr.f32.mxu0 0.0
    %1564 = vmatmul.mubr.f32.gmra.mrb[0].mxu0 %v1497
    %v1565 = vpop.f32.mrb[0].mxu0
    %v1566 = vadd.f32 %v1494, %v1565
    %v1567 = vpop.f32.mrb[0].mxu0
    %1568 = vdwg.mxu0
    %vm1569 = vcmask 254976
    %1570 = vst.msk [vmem:[#allocation13] sm:$0x3] %vm1569, %v1484
    %vm1571 = vcmask 25600
    %1572 = vst.msk [vmem:[#allocation12] sm:$0x3] %vm1571, %v1566
    // Predicated region
    $region66: #{encoder_forward.1} parent=1 // pred_check
      _
    $region67: #{encoder_forward.1} parent=1 // pred_check_branch
      %1574 = sbr.rel (0) target = $region69
    $region68: #{encoder_forward.1} parent=1 // pred_region
      %s1576 = ssub.s32 32, 32
      %1577 = vsyncadd [#allocation5], %s1576
      %s1579 = sshll.u32 [#allocation12], 4
      %s1580 = int_to_ptr.vmem [resolvable:$true] %s1579
      %1582 = dma.vmem_to_hbm [thread:$0]  %s1580, 32, %s11, [#allocation5]
    $region69: #{encoder_forward.1} parent=1 // pred_fallthru
      _
    // Predicated region
    $region70: #{encoder_forward.1} parent=1 // pred_check
      _
    $region71: #{encoder_forward.1} parent=1 // pred_check_branch
      %1584 = sbr.rel (0) target = $region73
    $region72: #{encoder_forward.1} parent=1 // pred_region
      %s1586 = ssub.s32 32, 32
      %1587 = vsyncadd [#allocation14], %s1586
      %s1589 = sshll.u32 [#allocation13], 4
      %s1590 = int_to_ptr.vmem [resolvable:$true] %s1589
      %1592 = dma.vmem_to_hbm [thread:$0]  %s1590, 32, %s12, [#allocation14]
    $region73: #{encoder_forward.1} parent=1 // pred_fallthru
      _
    // Predicated region
    $region74: #{encoder_forward.1} parent=1 // pred_check
      _
    $region75: #{encoder_forward.1} parent=1 // pred_check_branch
      %1594 = sbr.rel (0) target = $region77
    $region76: #{encoder_forward.1} parent=1 // pred_region
      %1595 = dma.done [#allocation5], 32
    $region77: #{encoder_forward.1} parent=1 // pred_fallthru
      _
    // Predicated region
    $region78: #{encoder_forward.1} parent=1 // pred_check
      _
    $region79: #{encoder_forward.1} parent=1 // pred_check_branch
      %1597 = sbr.rel (0) target = $region81
    $region80: #{encoder_forward.1} parent=1 // pred_region
      %1598 = dma.done [#allocation14], 32
    $region81: #{encoder_forward.1} parent=1 // pred_fallthru
      _
    %1599 = vsyncpa [#allocation4], 1
    %1600 = vsyncpa [#allocation7], 1
    %1601 = vsyncpa [#allocation10], 1
    %1602 = vsyncpa [#allocation5], 1
    %1603 = vsyncpa [#allocation14], 1

</llo_original>
